<compile_context>
chip_gen: v7x
topology: tpu7x:2x2x1
jax: 0.10.0
libtpu: 0.0.40
codegen_flags: <defaults>
</compile_context>

<pallas_src>
import math

import jax
import jax.numpy as jnp
from jax import lax
from jax.experimental import pallas as pl
from jax.experimental.pallas import tpu as pltpu

# ---------------- geometry ----------------
IMG = 64            # analog of 1024 (image side)
EXTRA = 16          # analog of the 16 extra rows (1040 = 1024 + 16)
NUM_POINTS = 16
ITEMS_PER_POINT = 3
C = 64              # analog of 256 embedding channels
G = 8               # analog of the 64x64 embedding grid
M = G * G           # number of image tokens
assert IMG * IMG == C * G * G
# these equalities let the kernel read the channels-first embedding directly
# out of the (IMG+EXTRA, IMG) input slab at this scaled geometry.
assert IMG == C and IMG == M

TOK = 32            # padded token rows: 1 mask token + 16 points + 15 zero rows
PROMPT_W = 8        # packed prompt feature width

# -------- constant-slab row layout (ONE VMEM input, width 2*C = 128) --------
R_PROMPT = 0                       # ( 8,128)  [:, :C]=Fourier rows   [:, C:]=embed rows
R_QO     = R_PROMPT + PROMPT_W     # (64,128)  [:, :C]=wq/sqrt(C)     [:, C:]=wo
R_KVT    = R_QO + C                # (128,64)  [:, :C]=[wk.T ; wv.T]
R_PEKT   = R_KVT + 2 * C           # (64, 64)  [:, :C]=(img_pe @ wk).T
R_W12    = R_PEKT + C              # (64,128)  [:, :C]=w1             [:, C:]=w2
R_SELR   = R_W12 + C               # ( 8,128)  [:, :M]=Sel_row        [:, C:]=ucol.T
R_SELCT  = R_SELR + G              # (64,  8)  [:, :G]=Sel_col.T
R_UROW   = R_SELCT + M             # (64,  8)  [:, :G]=urow
SLAB_ROWS = R_UROW + IMG           # 464 rows, all offsets sublane (8) aligned


# ---------------- Pallas kernel ----------------
def sam_decoder_kernel(
    gate_ref,      # SMEM (1, 1) int32  1 if any valid point else 0
    prompt_ref,    # (TOK, 8)   packed prompt rows [cx, cy, bias, bg, fg, pad, mtok, 0]
    x_ref,         # (IMG+EXTRA, IMG)   raw input slab; rows 0:C = channels-first image
    w_ref,         # (SLAB_ROWS, 2C)    packed constants (see layout above)
    out_ref,       # (IMG+EXTRA, IMG)   output mask, rows IMG: are the pad rows
):
    f32 = jnp.float32

    # Zero fill covers the F.pad rows AND the torch "no active points -> zeros"
    # early return; the gated branch overwrites rows [0:IMG].
    out_ref[...] = jnp.zeros_like(out_ref)

    @pl.when(gate_ref[0, 0] != 0)
    def _():
        # --- prompt encoding: one (TOK,8)@(8,2C) matmul ----------------------
        te = jnp.dot(prompt_ref[...], w_ref[R_PROMPT:R_PROMPT + PROMPT_W, :],
                     preferred_element_type=f32)                     # (TOK, 2C)
        tokens = jnp.sin(te[:, 0:C]) + te[:, C:2 * C]                # (TOK, C)

        # --- image embedding, channels-first (C, M) --------------------------
        imgcf = x_ref[0:C, :]                                        # (C, M)

        # --- token -> image cross attention ----------------------------------
        # k^T = wk^T @ img_cf + (img_pe @ wk)^T ; v^T = wv^T @ img_cf, fused.
        q = jnp.dot(tokens, w_ref[R_QO:R_QO + C, 0:C],
                    preferred_element_type=f32)                      # (TOK, C) (wq pre-scaled)
        kvt = jnp.dot(w_ref[R_KVT:R_KVT + 2 * C, 0:C], imgcf,
                      preferred_element_type=f32)                    # (2C, M)
        kt = kvt[0:C, :] + w_ref[R_PEKT:R_PEKT + C, 0:C]             # (C, M)
        vt = kvt[C:2 * C, :]                                         # (C, M)

        scores = jnp.dot(q, kt, preferred_element_type=f32)          # (TOK, M), no transpose
        scores = scores - jnp.max(scores, axis=-1, keepdims=True)
        p = jnp.exp(scores)
        denom = jnp.sum(p, axis=-1, keepdims=True)                   # (TOK, 1)
        pv = lax.dot_general(p, vt, (((1,), (1,)), ((), ())),
                             preferred_element_type=f32)             # (TOK, C)
        attn = pv / denom            # exact divide (review correctness note)
        tokens = tokens + jnp.dot(attn, w_ref[R_QO:R_QO + C, C:2 * C],
                                  preferred_element_type=f32)

        # --- hypernetwork MLP on the mask token (8-row tile, row 0 is used) ---
        toks8 = tokens[0:8, :]
        h = jnp.maximum(jnp.dot(toks8, w_ref[R_W12:R_W12 + C, 0:C],
                                preferred_element_type=f32), 0.0)
        hyper8 = jnp.dot(h, w_ref[R_W12:R_W12 + C, C:2 * C],
                         preferred_element_type=f32)                 # (8, C)

        # --- low-res mask + separable bilinear upsample -----------------------
        # maskrow[m] = sum_c hyper[c] * img_cf[c, m]
        maskrow = jnp.dot(hyper8, imgcf,
                          preferred_element_type=f32)[0:1, :]        # (1, M)
        # matmul-based "reshape" of the flat mask onto the (G, G) grid:
        # low[i, j] = maskrow[i*G + j]   (avoids an unsupported vector reshape)
        low = jnp.dot(w_ref[R_SELR:R_SELR + G, 0:M] * maskrow,
                      w_ref[R_SELCT:R_SELCT + M, 0:G],
                      preferred_element_type=f32)                    # (G, G)
        z = jnp.dot(low, w_ref[R_SELR:R_SELR + G, C:C + IMG],
                    preferred_element_type=f32)                      # (G, IMG)  low @ ucol^T
        up = jnp.dot(w_ref[R_UROW:R_UROW + IMG, 0:G], z,
                     preferred_element_type=f32)                     # (IMG, IMG) urow @ (.)

        out_ref[0:IMG, :] = up
        # TODO(synk): at full-scale geometry (IMG=1024, C=256, M=4096) add a grid
        # over output-row tiles with dimension_semantics=("parallel",) so both
        # v7x TensorCores are used; keep this single-shot form at the test shape.


# ---------------- glue helpers ----------------
def _upsample_matrix(out_size, in_size):
    """Bilinear (align_corners=False) 1-D upsample matrix, shape (out, in)."""
    i = jnp.arange(out_size, dtype=jnp.float32)
    s = (i + 0.5) * in_size / out_size - 0.5
    s = jnp.clip(s, 0.0, in_size - 1.0)
    lo = jnp.floor(s)
    w = s - lo
    lo_i = lo.astype(jnp.int32)
    hi_i = jnp.minimum(lo_i + 1, in_size - 1)
    u = jnp.zeros((out_size, in_size), jnp.float32)
    u = u.at[jnp.arange(out_size), lo_i].add(1.0 - w)
    u = u.at[jnp.arange(out_size), hi_i].add(w)
    return u


def init_params(key):
    ks = jax.random.split(key, 9)
    scale = 0.1
    gauss = jax.random.normal(ks[0], (2, C // 2), jnp.float32)
    labemb = scale * jax.random.normal(ks[1], (3, C), jnp.float32)   # bg, fg, pad
    mask_token = scale * jax.random.normal(ks[2], (1, C), jnp.float32)
    wq = scale * jax.random.normal(ks[3], (C, C), jnp.float32)
    wk = scale * jax.random.normal(ks[4], (C, C), jnp.float32)
    wv = scale * jax.random.normal(ks[5], (C, C), jnp.float32)
    wo = scale * jax.random.normal(ks[6], (C, C), jnp.float32)
    w1 = scale * jax.random.normal(ks[7], (C, C), jnp.float32)
    w2 = scale * jax.random.normal(ks[8], (C, C), jnp.float32)

    two_pi = 2.0 * math.pi
    # Fourier rows with 2*pi folded in; the phase row turns sin into cos on the
    # upper half of the lanes (cos(x) = sin(x + pi/2)) -> no in-kernel concat.
    gauss2 = two_pi * jnp.concatenate([gauss, gauss], axis=1)             # (2, C)
    phase = jnp.concatenate(
        [jnp.zeros((1, C // 2), jnp.float32),
         jnp.full((1, C // 2), 0.5 * math.pi, jnp.float32)], axis=1)      # (1, C)
    w_four = jnp.concatenate(
        [gauss2, phase, jnp.zeros((PROMPT_W - 3, C), jnp.float32)], axis=0)   # (8, C)
    # embedding rows aligned with prompt columns 3..6 (bg, fg, pad, mask token)
    w_emb = jnp.concatenate(
        [jnp.zeros((3, C), jnp.float32), labemb, mask_token,
         jnp.zeros((PROMPT_W - 7, C), jnp.float32)], axis=0)                  # (8, C)

    # dense positional encoding of the embedding grid, folded through wk offline.
    g1 = (jnp.arange(G, dtype=jnp.float32) + 0.5) / G
    yy, xx = jnp.meshgrid(g1, g1, indexing="ij")
    grid = jnp.stack([xx.reshape(-1), yy.reshape(-1)], axis=-1)               # (M, 2)
    tg = (2.0 * grid - 1.0) @ (two_pi * gauss)
    img_pe = jnp.concatenate([jnp.sin(tg), jnp.cos(tg)], axis=-1)             # (M, C)
    pekt = (img_pe @ wk).T                                                    # (C, M)

    # separable bilinear-upsample factors + "matrix reshape" selection matrices.
    urow = _upsample_matrix(IMG, G)                                           # (IMG, G)
    ucol = _upsample_matrix(IMG, G)                                           # (IMG, G)
    m_idx = jnp.arange(M)
    sel_row = (m_idx[None, :] // G == jnp.arange(G)[:, None]).astype(jnp.float32)   # (G, M)
    sel_colt = (m_idx[:, None] % G == jnp.arange(G)[None, :]).astype(jnp.float32)   # (M, G)

    # one constant slab -> one DMA, one double-buffered VMEM stream.
    slab = jnp.zeros((SLAB_ROWS, 2 * C), jnp.float32)
    slab = slab.at[R_PROMPT:R_PROMPT + PROMPT_W, 0:C].set(w_four)
    slab = slab.at[R_PROMPT:R_PROMPT + PROMPT_W, C:2 * C].set(w_emb)
    slab = slab.at[R_QO:R_QO + C, 0:C].set(wq / math.sqrt(C))   # 1/sqrt(C) folded in
    slab = slab.at[R_QO:R_QO + C, C:2 * C].set(wo)
    slab = slab.at[R_KVT:R_KVT + C, 0:C].set(wk.T)
    slab = slab.at[R_KVT + C:R_KVT + 2 * C, 0:C].set(wv.T)
    slab = slab.at[R_PEKT:R_PEKT + C, 0:C].set(pekt)
    slab = slab.at[R_W12:R_W12 + C, 0:C].set(w1)
    slab = slab.at[R_W12:R_W12 + C, C:2 * C].set(w2)
    slab = slab.at[R_SELR:R_SELR + G, 0:M].set(sel_row)
    slab = slab.at[R_SELR:R_SELR + G, C:C + IMG].set(ucol.T)
    slab = slab.at[R_SELCT:R_SELCT + M, 0:G].set(sel_colt)
    slab = slab.at[R_UROW:R_UROW + IMG, 0:G].set(urow)
    # TODO(synk): at full-scale SAM geometry cast the MXU-operand blocks of this
    # slab to bf16 (keep softmax/elementwise math f32 for v5e); the separable
    # upsample/selection constants stay ~1 MiB, well inside v7x 64 MiB VMEM.
    return {"slab": slab}


def sam_decoder_nuke_forward(x, params):
    """JAX/Pallas equivalent of SamDecoderNuke.forward (scaled geometry)."""
    # ---- parse the packed point row (analog of row 1039) ----
    row = x[0, 0, IMG + EXTRA - 1, : NUM_POINTS * ITEMS_PER_POINT]
    pts_lab = row.reshape(NUM_POINTS, ITEMS_PER_POINT)
    points = pts_lab[:, 0:2].astype(jnp.float32)
    labels_fg = pts_lab[:, 2].astype(jnp.int32) < 1        # torch: labels < 1
    valid = jnp.all((points >= 1.0) & (points <= float(IMG)), axis=1)
    gate = jnp.any(valid).astype(jnp.int32).reshape(1, 1)

    # flip y like: active_points[:, 1] = 1024 - active_points[:, 1]
    points = points.at[:, 1].set(float(IMG) - points[:, 1])
    coords = 2.0 * (points / float(IMG)) - 1.0             # (N, 2) in [-1, 1]
    valid_f = valid.astype(jnp.float32)[:, None]

    # label class: 0=bg, 1=fg, 2=not-a-point (pad); class 3 = mask token (row 0)
    lab_idx = jnp.where(valid, jnp.where(labels_fg, 1, 0), 2)
    lab_onehot = jax.nn.one_hot(lab_idx, 4, dtype=jnp.float32)          # (N, 4)

    # packed prompt rows: cols [cx*v, cy*v, v(bias), bg, fg, pad, mtok, 0].
    # TODO(synk): this 48-scalar packing could move in-kernel via SMEM, at the
    # cost of awkward in-kernel scatter logic; kept in the (jit-fused) wrapper.
    pt_rows = jnp.concatenate([coords * valid_f, valid_f, lab_onehot], axis=1)  # (N, 7)
    pt_rows = jnp.pad(pt_rows, ((0, 0), (0, PROMPT_W - 7)))
    mtok_row = jnp.zeros((1, PROMPT_W), jnp.float32).at[0, 6].set(1.0)
    pad_rows = jnp.zeros((TOK - 1 - NUM_POINTS, PROMPT_W), jnp.float32)
    prompt = jnp.concatenate([mtok_row, pt_rows, pad_rows], axis=0)     # (TOK, 8)

    # ---- image embeddings ----
    # x[:, :, :IMG, :IMG].reshape(1, C, G, G) flattened channels-first is just a
    # contiguous reinterpretation of the top rows of x, so the kernel consumes
    # x directly (no wrapper transpose, no extra HBM pass).
    x2d = x.reshape(IMG + EXTRA, IMG)

    smem = pl.BlockSpec(memory_space=pltpu.MemorySpace.SMEM)
    vmem = pl.BlockSpec(memory_space=pltpu.MemorySpace.VMEM)
    out2d = pl.pallas_call(
        sam_decoder_kernel,
        out_shape=jax.ShapeDtypeStruct((IMG + EXTRA, IMG), jnp.float32),
        in_specs=[smem, vmem, vmem, vmem],
        out_specs=vmem,
    )(gate, prompt, x2d, params["slab"])

    # the F.pad(mask, (0, 0, 0, 16)) rows are already written in-kernel.
    return out2d[None, None, :, :]                          # (1, 1, IMG+EXTRA, IMG)


if __name__ == "__main__":
    key = jax.random.PRNGKey(0)
    k_x, k_p = jax.random.split(key)

    params = init_params(k_p)

    # deterministic input: (1, 1, IMG + EXTRA, IMG) with point data packed
    # into the last row (analog of row 1039 of a 1040 x 1024 input).
    x = jax.random.normal(k_x, (1, 1, IMG + EXTRA, IMG), jnp.float32)
    packed = []
    for i in range(NUM_POINTS):
        px = 4.0 + 3.0 * i
        py = 8.0 + 2.0 * i
        lab = float(i % 2)
        if i >= 12:           # make the last 4 points invalid (out of range)
            px = 0.0
        packed.extend([px, py, lab])
    packed = jnp.array(packed, dtype=jnp.float32)
    x = x.at[0, 0, IMG + EXTRA - 1, : NUM_POINTS * ITEMS_PER_POINT].set(packed)

    fwd = jax.jit(sam_decoder_nuke_forward)
    out = jax.block_until_ready(fwd(x, params))
    assert out.shape == (1, 1, IMG + EXTRA, IMG), out.shape
    assert out.dtype == jnp.float32
    print("KERNEL_OK")
</pallas_src>

<mosaic_0001>
module attributes {stable_mosaic.version = 11 : i64} {
  func.func @sam_decoder_kernel(%arg0: memref<1x1xi32, #tpu.memory_space<smem>>, %arg1: memref<32x8xf32, #tpu.memory_space<vmem>>, %arg2: memref<80x64xf32, #tpu.memory_space<vmem>>, %arg3: memref<464x128xf32, #tpu.memory_space<vmem>>, %arg4: memref<80x64xf32, #tpu.memory_space<vmem>>) attributes {dimension_semantics = [], scalar_prefetch = 0 : i64, scratch_operands = 0 : i64, tpu.core_type = #tpu.core_type<tc>} {
    %cst = arith.constant 0.000000e+00 : f32
    %0 = vector.broadcast %cst : f32 to vector<80x64xf32>
    %c0 = arith.constant 0 : index
    %c0_0 = arith.constant 0 : index
    %1 = vector.load %arg4[%c0, %c0_0] : memref<80x64xf32, #tpu.memory_space<vmem>>, vector<80x64xf32>
    tpu.vector_store %arg4[%c0, %c0_0], %0 {strides = array<i32>} : memref<80x64xf32, #tpu.memory_space<vmem>>, vector<80x64xf32>,
    %c0_1 = arith.constant 0 : index
    %c0_2 = arith.constant 0 : index
    %2 = memref.load %arg0[%c0_1, %c0_2] : memref<1x1xi32, #tpu.memory_space<smem>>
    %c0_i32 = arith.constant 0 : i32
    %3 = arith.cmpi ne, %2, %c0_i32 : i32
    %4 = arith.extui %3 : i1 to i32
    %c0_i32_3 = arith.constant 0 : i32
    %5 = arith.cmpi ne, %4, %c0_i32_3 : i32
    scf.if %5 {
      %c0_4 = arith.constant 0 : index
      %c0_5 = arith.constant 0 : index
      %6 = vector.load %arg1[%c0_4, %c0_5] : memref<32x8xf32, #tpu.memory_space<vmem>>, vector<32x8xf32>
      %c0_6 = arith.constant 0 : index
      %c0_7 = arith.constant 0 : index
      %7 = vector.load %arg3[%c0_6, %c0_7] : memref<464x128xf32, #tpu.memory_space<vmem>>, vector<8x128xf32>
      %cst_8 = arith.constant dense<0.000000e+00> : vector<32x128xf32>
      %8 = tpu.matmul %6, %7, %cst_8 {dimension_numbers = #tpu.dot_dimension_numbers<[1], [0], [0], [1], [0, 0, 1, 1], [], []>} : vector<32x8xf32>, vector<8x128xf32>, vector<32x128xf32> -> vector<32x128xf32>
      %9 = vector.extract_strided_slice %8 {offsets = [0, 0], sizes = [32, 64], strides = [1, 1]} : vector<32x128xf32> to vector<32x64xf32>
      %10 = math.sin %9 : vector<32x64xf32>
      %11 = vector.extract_strided_slice %8 {offsets = [0, 64], sizes = [32, 64], strides = [1, 1]} : vector<32x128xf32> to vector<32x64xf32>
      %12 = arith.addf %10, %11 : vector<32x64xf32>
      %c0_9 = arith.constant 0 : index
      %c0_10 = arith.constant 0 : index
      %13 = vector.load %arg2[%c0_9, %c0_10] : memref<80x64xf32, #tpu.memory_space<vmem>>, vector<64x64xf32>
      %c8 = arith.constant 8 : index
      %c0_11 = arith.constant 0 : index
      %14 = vector.load %arg3[%c8, %c0_11] : memref<464x128xf32, #tpu.memory_space<vmem>>, vector<64x64xf32>
      %cst_12 = arith.constant dense<0.000000e+00> : vector<32x64xf32>
      %15 = tpu.matmul %12, %14, %cst_12 {dimension_numbers = #tpu.dot_dimension_numbers<[1], [0], [0], [1], [0, 0, 1, 1], [], []>} : vector<32x64xf32>, vector<64x64xf32>, vector<32x64xf32> -> vector<32x64xf32>
      %c72 = arith.constant 72 : index
      %c0_13 = arith.constant 0 : index
      %16 = vector.load %arg3[%c72, %c0_13] : memref<464x128xf32, #tpu.memory_space<vmem>>, vector<128x64xf32>
      %cst_14 = arith.constant dense<0.000000e+00> : vector<128x64xf32>
      %17 = tpu.matmul %16, %13, %cst_14 {dimension_numbers = #tpu.dot_dimension_numbers<[1], [0], [0], [1], [0, 0, 1, 1], [], []>} : vector<128x64xf32>, vector<64x64xf32>, vector<128x64xf32> -> vector<128x64xf32>
      %18 = vector.extract_strided_slice %17 {offsets = [0, 0], sizes = [64, 64], strides = [1, 1]} : vector<128x64xf32> to vector<64x64xf32>
      %c200 = arith.constant 200 : index
      %c0_15 = arith.constant 0 : index
      %19 = vector.load %arg3[%c200, %c0_15] : memref<464x128xf32, #tpu.memory_space<vmem>>, vector<64x64xf32>
      %20 = arith.addf %18, %19 : vector<64x64xf32>
      %21 = vector.extract_strided_slice %17 {offsets = [64, 0], sizes = [64, 64], strides = [1, 1]} : vector<128x64xf32> to vector<64x64xf32>
      %cst_16 = arith.constant dense<0.000000e+00> : vector<32x64xf32>
      %22 = tpu.matmul %15, %20, %cst_16 {dimension_numbers = #tpu.dot_dimension_numbers<[1], [0], [0], [1], [0, 0, 1, 1], [], []>} : vector<32x64xf32>, vector<64x64xf32>, vector<32x64xf32> -> vector<32x64xf32>
      %cst_17 = arith.constant dense<0xFF800000> : vector<32xf32>
      %23 = vector.multi_reduction <maximumf>, %22, %cst_17 [1] : vector<32x64xf32> to vector<32xf32>
      %24 = vector.shape_cast %23 : vector<32xf32> to vector<32x1xf32>
      %25 = vector.broadcast %24 : vector<32x1xf32> to vector<32x64xf32>
      %26 = arith.subf %22, %25 : vector<32x64xf32>
      %27 = math.exp %26 : vector<32x64xf32>
      %cst_18 = arith.constant dense<0.000000e+00> : vector<32xf32>
      %28 = vector.multi_reduction <add>, %27, %cst_18 [1] : vector<32x64xf32> to vector<32xf32>
      %29 = vector.shape_cast %28 : vector<32xf32> to vector<32x1xf32>
      %cst_19 = arith.constant dense<0.000000e+00> : vector<32x64xf32>
      %30 = tpu.matmul %27, %21, %cst_19 {dimension_numbers = #tpu.dot_dimension_numbers<[1], [1], [0], [0], [0, 0, 1, 0], [], []>} : vector<32x64xf32>, vector<64x64xf32>, vector<32x64xf32> -> vector<32x64xf32>
      %31 = vector.broadcast %29 : vector<32x1xf32> to vector<32x64xf32>
      %32 = arith.divf %30, %31 : vector<32x64xf32>
      %c8_20 = arith.constant 8 : index
      %c64 = arith.constant 64 : index
      %33 = vector.load %arg3[%c8_20, %c64] : memref<464x128xf32, #tpu.memory_space<vmem>>, vector<64x64xf32>
      %cst_21 = arith.constant dense<0.000000e+00> : vector<32x64xf32>
      %34 = tpu.matmul %32, %33, %cst_21 {dimension_numbers = #tpu.dot_dimension_numbers<[1], [0], [0], [1], [0, 0, 1, 1], [], []>} : vector<32x64xf32>, vector<64x64xf32>, vector<32x64xf32> -> vector<32x64xf32>
      %35 = arith.addf %12, %34 : vector<32x64xf32>
      %36 = vector.extract_strided_slice %35 {offsets = [0, 0], sizes = [8, 64], strides = [1, 1]} : vector<32x64xf32> to vector<8x64xf32>
      %c264 = arith.constant 264 : index
      %c0_22 = arith.constant 0 : index
      %37 = vector.load %arg3[%c264, %c0_22] : memref<464x128xf32, #tpu.memory_space<vmem>>, vector<64x64xf32>
      %cst_23 = arith.constant dense<0.000000e+00> : vector<8x64xf32>
      %38 = tpu.matmul %36, %37, %cst_23 {dimension_numbers = #tpu.dot_dimension_numbers<[1], [0], [0], [1], [0, 0, 1, 1], [], []>} : vector<8x64xf32>, vector<64x64xf32>, vector<8x64xf32> -> vector<8x64xf32>
      %cst_24 = arith.constant 0.000000e+00 : f32
      %39 = vector.broadcast %cst_24 : f32 to vector<8x64xf32>
      %40 = arith.maximumf %38, %39 : vector<8x64xf32>
      %c264_25 = arith.constant 264 : index
      %c64_26 = arith.constant 64 : index
      %41 = vector.load %arg3[%c264_25, %c64_26] : memref<464x128xf32, #tpu.memory_space<vmem>>, vector<64x64xf32>
      %cst_27 = arith.constant dense<0.000000e+00> : vector<8x64xf32>
      %42 = tpu.matmul %40, %41, %cst_27 {dimension_numbers = #tpu.dot_dimension_numbers<[1], [0], [0], [1], [0, 0, 1, 1], [], []>} : vector<8x64xf32>, vector<64x64xf32>, vector<8x64xf32> -> vector<8x64xf32>
      %cst_28 = arith.constant dense<0.000000e+00> : vector<8x64xf32>
      %43 = tpu.matmul %42, %13, %cst_28 {dimension_numbers = #tpu.dot_dimension_numbers<[1], [0], [0], [1], [0, 0, 1, 1], [], []>} : vector<8x64xf32>, vector<64x64xf32>, vector<8x64xf32> -> vector<8x64xf32>
      %44 = vector.extract_strided_slice %43 {offsets = [0, 0], sizes = [1, 64], strides = [1, 1]} : vector<8x64xf32> to vector<1x64xf32>
      %c328 = arith.constant 328 : index
      %c0_29 = arith.constant 0 : index
      %45 = vector.load %arg3[%c328, %c0_29] : memref<464x128xf32, #tpu.memory_space<vmem>>, vector<8x64xf32>
      %46 = vector.broadcast %44 : vector<1x64xf32> to vector<8x64xf32>
      %47 = arith.mulf %45, %46 : vector<8x64xf32>
      %c336 = arith.constant 336 : index
      %c0_30 = arith.constant 0 : index
      %48 = vector.load %arg3[%c336, %c0_30] : memref<464x128xf32, #tpu.memory_space<vmem>>, vector<64x8xf32>
      %cst_31 = arith.constant dense<0.000000e+00> : vector<8x8xf32>
      %49 = tpu.matmul %47, %48, %cst_31 {dimension_numbers = #tpu.dot_dimension_numbers<[1], [0], [0], [1], [0, 0, 1, 1], [], []>} : vector<8x64xf32>, vector<64x8xf32>, vector<8x8xf32> -> vector<8x8xf32>
      %c328_32 = arith.constant 328 : index
      %c64_33 = arith.constant 64 : index
      %50 = vector.load %arg3[%c328_32, %c64_33] : memref<464x128xf32, #tpu.memory_space<vmem>>, vector<8x64xf32>
      %cst_34 = arith.constant dense<0.000000e+00> : vector<8x64xf32>
      %51 = tpu.matmul %49, %50, %cst_34 {dimension_numbers = #tpu.dot_dimension_numbers<[1], [0], [0], [1], [0, 0, 1, 1], [], []>} : vector<8x8xf32>, vector<8x64xf32>, vector<8x64xf32> -> vector<8x64xf32>
      %c400 = arith.constant 400 : index
      %c0_35 = arith.constant 0 : index
      %52 = vector.load %arg3[%c400, %c0_35] : memref<464x128xf32, #tpu.memory_space<vmem>>, vector<64x8xf32>
      %cst_36 = arith.constant dense<0.000000e+00> : vector<64x64xf32>
      %53 = tpu.matmul %52, %51, %cst_36 {dimension_numbers = #tpu.dot_dimension_numbers<[1], [0], [0], [1], [0, 0, 1, 1], [], []>} : vector<64x8xf32>, vector<8x64xf32>, vector<64x64xf32> -> vector<64x64xf32>
      %c0_37 = arith.constant 0 : index
      %c0_38 = arith.constant 0 : index
      %54 = vector.load %arg4[%c0_37, %c0_38] : memref<80x64xf32, #tpu.memory_space<vmem>>, vector<64x64xf32>
      tpu.vector_store %arg4[%c0_37, %c0_38], %53 {strides = array<i32>} : memref<80x64xf32, #tpu.memory_space<vmem>>, vector<64x64xf32>,
    } else {
    }
    return
  }
}

</mosaic_0001>

<llo_original>
// kernel: squeeze.3
$region0: #{squeeze.3}
  %s0 = inlined_call_operand.vmem [shape: f32[48], index: 0, kind: input, shape index: {}]
  %s1 = inlined_call_operand.vmem [shape: f32[16,3], index: 1, kind: output, shape index: {}]
  $region1: #{squeeze.3} parent=0
    #allocation0 [shape = 'u8[4096]{0}', space=vmem, size = 0x1000, scoped, tag = 'scoped mem for input reshape']
    %s3 = sshllo.u32 0, 1
    %v4 = vld [vmem:[%s0] sm:%s3]
    %5 = vst [vmem:[#allocation0] sm:%s3] %v4
    %v6 = vld [vmem:[#allocation0] sm:$0x1]
    %vm7 = vcmask 23552
    %8 = vst.msk [vmem:[%s1] sm:$0x1] %vm7, %v6
    %v9 = vld [vmem:[#allocation0] sm:$0x1]
    %10 = vrot.lane.b32.xlu0 %v9, 125
    %v11 = vpop.permute.xlu0 %10
    %vm12 = vcmask 23552
    %s13 = scalar_lea.vmem %s1, 1
    %14 = vst.msk [vmem:[%s13] sm:$0x1] %vm12, %v11
    %v15 = vld [vmem:[#allocation0] sm:$0x1]
    %16 = vrot.lane.b32.xlu0 %v15, 122
    %v17 = vpop.permute.xlu0 %16
    %vm18 = vcmask 23552
    %s19 = scalar_lea.vmem %s1, 2
    %20 = vst.msk [vmem:[%s19] sm:$0x1] %vm18, %v17
    %v21 = vld [vmem:[#allocation0] sm:$0x1]
    %22 = vrot.lane.b32.xlu0 %v21, 119
    %v23 = vpop.permute.xlu0 %22
    %vm24 = vcmask 23552
    %s25 = scalar_lea.vmem %s1, 3
    %26 = vst.msk [vmem:[%s25] sm:$0x1] %vm24, %v23
    %v27 = vld [vmem:[#allocation0] sm:$0x1]
    %28 = vrot.lane.b32.xlu0 %v27, 116
    %v29 = vpop.permute.xlu0 %28
    %vm30 = vcmask 23552
    %s31 = scalar_lea.vmem %s1, 4
    %32 = vst.msk [vmem:[%s31] sm:$0x1] %vm30, %v29
    %v33 = vld [vmem:[#allocation0] sm:$0x1]
    %34 = vrot.lane.b32.xlu0 %v33, 113
    %v35 = vpop.permute.xlu0 %34
    %vm36 = vcmask 23552
    %s37 = scalar_lea.vmem %s1, 5
    %38 = vst.msk [vmem:[%s37] sm:$0x1] %vm36, %v35
    %v39 = vld [vmem:[#allocation0] sm:$0x1]
    %40 = vrot.lane.b32.xlu0 %v39, 110
    %v41 = vpop.permute.xlu0 %40
    %vm42 = vcmask 23552
    %s43 = scalar_lea.vmem %s1, 6
    %44 = vst.msk [vmem:[%s43] sm:$0x1] %vm42, %v41
    %v45 = vld [vmem:[#allocation0] sm:$0x1]
    %46 = vrot.lane.b32.xlu0 %v45, 107
    %v47 = vpop.permute.xlu0 %46
    %vm48 = vcmask 23552
    %s49 = scalar_lea.vmem %s1, 7
    %50 = vst.msk [vmem:[%s49] sm:$0x1] %vm48, %v47
    %v51 = vld [vmem:[#allocation0] sm:$0x1]
    %52 = vrot.lane.b32.xlu0 %v51, 104
    %v53 = vpop.permute.xlu0 %52
    %vm54 = vcmask 23552
    %s55 = scalar_lea.vmem %s1, 8
    %56 = vst.msk [vmem:[%s55] sm:$0x1] %vm54, %v53
    %v57 = vld [vmem:[#allocation0] sm:$0x1]
    %58 = vrot.lane.b32.xlu0 %v57, 101
    %v59 = vpop.permute.xlu0 %58
    %vm60 = vcmask 23552
    %s61 = scalar_lea.vmem %s1, 9
    %62 = vst.msk [vmem:[%s61] sm:$0x1] %vm60, %v59
    %v63 = vld [vmem:[#allocation0] sm:$0x1]
    %64 = vrot.lane.b32.xlu0 %v63, 98
    %v65 = vpop.permute.xlu0 %64
    %vm66 = vcmask 23552
    %s67 = scalar_lea.vmem %s1, 10
    %68 = vst.msk [vmem:[%s67] sm:$0x1] %vm66, %v65
    %v69 = vld [vmem:[#allocation0] sm:$0x1]
    %70 = vrot.lane.b32.xlu0 %v69, 95
    %v71 = vpop.permute.xlu0 %70
    %vm72 = vcmask 23552
    %s73 = scalar_lea.vmem %s1, 11
    %74 = vst.msk [vmem:[%s73] sm:$0x1] %vm72, %v71
    %v75 = vld [vmem:[#allocation0] sm:$0x1]
    %76 = vrot.lane.b32.xlu0 %v75, 92
    %v77 = vpop.permute.xlu0 %76
    %vm78 = vcmask 23552
    %s79 = scalar_lea.vmem %s1, 12
    %80 = vst.msk [vmem:[%s79] sm:$0x1] %vm78, %v77
    %v81 = vld [vmem:[#allocation0] sm:$0x1]
    %82 = vrot.lane.b32.xlu0 %v81, 89
    %v83 = vpop.permute.xlu0 %82
    %vm84 = vcmask 23552
    %s85 = scalar_lea.vmem %s1, 13
    %86 = vst.msk [vmem:[%s85] sm:$0x1] %vm84, %v83
    %v87 = vld [vmem:[#allocation0] sm:$0x1]
    %88 = vrot.lane.b32.xlu0 %v87, 86
    %v89 = vpop.permute.xlu0 %88
    %vm90 = vcmask 23552
    %s91 = scalar_lea.vmem %s1, 14
    %92 = vst.msk [vmem:[%s91] sm:$0x1] %vm90, %v89
    %v93 = vld [vmem:[#allocation0] sm:$0x1]
    %94 = vrot.lane.b32.xlu0 %v93, 83
    %v95 = vpop.permute.xlu0 %94
    %vm96 = vcmask 23552
    %s97 = scalar_lea.vmem %s1, 15
    %98 = vst.msk [vmem:[%s97] sm:$0x1] %vm96, %v95

// kernel: sam_decoder_nuke_forward.1
$region0: #{sam_decoder_nuke_forward.1}
  #allocation0 [shape = 'u32[]', space=smem, size = 0x4, offset = 0x4, fixed_abs, tag = 'smem constant byte address 0x4 - core index']
  #allocation1 [shape = 'u32[144,128]{1,0:T(1,128)}', space=vmem, size = 0x12000, scoped, tag = 'internal scratch']
  #allocation2 [shape = 's32[1,1]{1,0:T(1,128)S(6)}', space=smem, size = 0x200, scoped, tag = 'scoped memory for sam_decoder_nuke_forward.1']
  %s0 = inlined_call_operand.<no memory space> [shape: s32[1,1], index: 0, kind: input, shape index: {}]
  %s1 = inlined_call_operand.vmem [shape: f32[32,8], index: 1, kind: input, shape index: {}]
  %s2 = inlined_call_operand.vmem [shape: f32[80,64], index: 2, kind: input, shape index: {}]
  %s3 = inlined_call_operand.vmem [shape: f32[464,128], index: 3, kind: input, shape index: {}]
  %s4 = inlined_call_operand.vmem [shape: f32[80,64], index: 4, kind: output, shape index: {}]
  %s5 = sld [smem:[#allocation0]]
  $region30: #{sam_decoder_nuke_forward.1} parent=0
    _
  %s7 = ssub.s32 1, %s5
  %s8 = scalar_select 0, %s7, %s5
  %9 = sst [smem:[#allocation2]] %s0
  // Predicated region
  $region2: #{sam_decoder_nuke_forward.1} parent=0 // pred_check
    _
  $region3: #{sam_decoder_nuke_forward.1} parent=0 // pred_check_branch
    %11 = sbr.rel (0) target = $region5
  $region4: #{sam_decoder_nuke_forward.1} parent=0 // pred_region
    _
  $region5: #{sam_decoder_nuke_forward.1} parent=0 // pred_fallthru
    _
  // Predicated region
  $region6: #{sam_decoder_nuke_forward.1} parent=0 // pred_check
    _
  $region7: #{sam_decoder_nuke_forward.1} parent=0 // pred_check_branch
    %13 = sbr.rel (0) target = $region9
  $region8: #{sam_decoder_nuke_forward.1} parent=0 // pred_region
    _
  $region9: #{sam_decoder_nuke_forward.1} parent=0 // pred_fallthru
    _
  // Predicated region
  $region10: #{sam_decoder_nuke_forward.1} parent=0 // pred_check
    _
  $region11: #{sam_decoder_nuke_forward.1} parent=0 // pred_check_branch
    %15 = sbr.rel (0) target = $region13
  $region12: #{sam_decoder_nuke_forward.1} parent=0 // pred_region
    _
  $region13: #{sam_decoder_nuke_forward.1} parent=0 // pred_fallthru
    _
  // Predicated region
  $region14: #{sam_decoder_nuke_forward.1} parent=0 // pred_check
    _
  $region15: #{sam_decoder_nuke_forward.1} parent=0 // pred_check_branch
    %17 = sbr.rel (0) target = $region17
  $region16: #{sam_decoder_nuke_forward.1} parent=0 // pred_region
    _
  $region17: #{sam_decoder_nuke_forward.1} parent=0 // pred_fallthru
    _
  %vm18 = vcmask 523264
  %19 = vst.msk [vmem:[%s4] sm:$0xff] %vm18, 0.0
  %20 = vst.msk [vmem:[%s4 + $0x8] sm:$0xff] %vm18, 0.0
  %21 = vst.msk [vmem:[%s4 + $0x10] sm:$0xff] %vm18, 0.0
  %22 = vst.msk [vmem:[%s4 + $0x18] sm:$0xff] %vm18, 0.0
  %23 = vst.msk [vmem:[%s4 + $0x20] sm:$0xff] %vm18, 0.0
  %24 = vst.msk [vmem:[%s4 + $0x28] sm:$0xff] %vm18, 0.0
  %25 = vst.msk [vmem:[%s4 + $0x30] sm:$0xff] %vm18, 0.0
  %26 = vst.msk [vmem:[%s4 + $0x38] sm:$0xff] %vm18, 0.0
  %27 = vst.msk [vmem:[%s4 + $0x40] sm:$0xff] %vm18, 0.0
  %28 = vst.msk [vmem:[%s4 + $0x48] sm:$0xff] %vm18, 0.0
  %s29 = sld [smem:[#allocation2]]
  %p30 = scmp.ne.s32.totalorder %s29, 0
  // Predicated region
  $region18: #{sam_decoder_nuke_forward.1} parent=0 // pred_check
    %p31 = pneg %p30
  $region19: #{sam_decoder_nuke_forward.1} parent=0 // pred_check_branch
    %33 = sbr.rel (%p31) target = $region21
  $region20: #{sam_decoder_nuke_forward.1} parent=0 // pred_region
    %v34 = vld [vmem:[%s1] sm:$0xff]
    %v35 = vld [vmem:[%s1 + $0x8] sm:$0xff]
    %v36 = vld [vmem:[%s1 + $0x10] sm:$0xff]
    %v37 = vld [vmem:[%s1 + $0x18] sm:$0xff]
    %v38 = vld [vmem:[%s3] sm:$0xff]
    %vm39 = vcmask 64512
    %v41 = vsel %vm39, %v34, 0
    %v44 = vsel %vm39, %v35, 0
    %v47 = vsel %vm39, %v36, 0
    %v50 = vsel %vm39, %v37, 0
    %52 = vmatprep.subr.mxu0 0.0
    %53 = vmatpush1.msra.mxu0 %v38
    %54 = vmatprep.subr.mxu0 0.0
    %55 = vmatpush1.msra.mxu0 0.0
    %56 = vmatprep.subr.mxu0 0.0
    %57 = vmatpush1.msra.mxu0 0.0
    %58 = vmatprep.subr.mxu0 0.0
    %59 = vmatpush1.msra.mxu0 0.0
    %60 = vmatprep.subr.mxu0 0.0
    %61 = vmatpush1.msra.mxu0 0.0
    %62 = vmatprep.subr.mxu0 0.0
    %63 = vmatpush1.msra.mxu0 0.0
    %64 = vmatprep.subr.mxu0 0.0
    %65 = vmatpush1.msra.mxu0 0.0
    %66 = vmatprep.subr.mxu0 0.0
    %67 = vmatpush1.msra.mxu0 0.0
    %68 = vmatprep.subr.mxu0 0.0
    %69 = vmatpush1.msra.mxu0 0.0
    %70 = vmatprep.subr.mxu0 0.0
    %71 = vmatpush1.msra.mxu0 0.0
    %72 = vmatprep.subr.mxu0 0.0
    %73 = vmatpush1.msra.mxu0 0.0
    %74 = vmatprep.subr.mxu0 0.0
    %75 = vmatpush1.msra.mxu0 0.0
    %76 = vmatprep.subr.mxu0 0.0
    %77 = vmatpush1.msra.mxu0 0.0
    %78 = vmatprep.subr.mxu0 0.0
    %79 = vmatpush1.msra.mxu0 0.0
    %80 = vmatprep.subr.mxu0 0.0
    %81 = vmatpush1.msra.mxu0 0.0
    %82 = vmatprep.subr.mxu0 0.0
    %83 = vmatpush1.msra.mxu0 0.0
    %84 = vmatprep.subr.mxu0 0.0
    %85 = vmatpush1.msra.mxu0 0.0
    %86 = vmatprep.subr.mxu0 0.0
    %87 = vmatpush1.msra.mxu0 0.0
    %88 = vmatprep.subr.mxu0 0.0
    %89 = vmatpush1.msra.mxu0 0.0
    %90 = vmatprep.subr.mxu0 0.0
    %91 = vmatpush1.msra.mxu0 0.0
    %92 = vmatprep.subr.mxu0 0.0
    %93 = vmatpush1.msra.mxu0 0.0
    %94 = vmatprep.subr.mxu0 0.0
    %95 = vmatpush1.msra.mxu0 0.0
    %96 = vmatprep.subr.mxu0 0.0
    %97 = vmatpush1.msra.mxu0 0.0
    %98 = vmatprep.subr.mxu0 0.0
    %99 = vmatpush1.msra.mxu0 0.0
    %100 = vmatprep.subr.mxu0 0.0
    %101 = vmatpush1.msra.mxu0 0.0
    %102 = vmatprep.subr.mxu0 0.0
    %103 = vmatpush1.msra.mxu0 0.0
    %104 = vmatprep.subr.mxu0 0.0
    %105 = vmatpush1.msra.mxu0 0.0
    %106 = vmatprep.subr.mxu0 0.0
    %107 = vmatpush1.msra.mxu0 0.0
    %108 = vmatprep.subr.mxu0 0.0
    %109 = vmatpush1.msra.mxu0 0.0
    %110 = vmatprep.subr.mxu0 0.0
    %111 = vmatpush1.msra.mxu0 0.0
    %112 = vmatprep.subr.mxu0 0.0
    %113 = vmatpush1.msra.mxu0 0.0
    %114 = vmatprep.subr.mxu0 0.0
    %115 = vmatpush1.msra.mxu0 0.0
    %116 = vmatprep.mubr.f32.mxu0 0.0
    %117 = vmatmul.mubr.f32.gmra.mrb[0].mxu0 %v41
    %v118 = vpop.f32.mrb[0].mxu0
    %v119 = vadd.f32 0.0, %v118
    %v120 = vpop.f32.mrb[0].mxu0
    %121 = vmatprep.mubr.f32.mxu0 0.0
    %122 = vmatmul.mubr.f32.gmra.mrb[0].mxu0 %v44
    %v123 = vpop.f32.mrb[0].mxu0
    %v124 = vadd.f32 0.0, %v123
    %v125 = vpop.f32.mrb[0].mxu0
    %126 = vmatprep.mubr.f32.mxu0 0.0
    %127 = vmatmul.mubr.f32.gmra.mrb[0].mxu0 %v47
    %v128 = vpop.f32.mrb[0].mxu0
    %v129 = vadd.f32 0.0, %v128
    %v130 = vpop.f32.mrb[0].mxu0
    %131 = vmatprep.mubr.f32.mxu0 0.0
    %132 = vmatmul.mubr.f32.gmra.mrb[0].mxu0 %v50
    %v133 = vpop.f32.mrb[0].mxu0
    %v134 = vadd.f32 0.0, %v133
    %v135 = vpop.f32.mrb[0].mxu0
    %136 = vdwg.mxu0
    %v137 = vand.u32 2147483647, %v119
    %vm138 = vcmp.le.f32.partialorder %v137, 0.7853982
    %vm139 = vcmp.lt.s32.totalorder %v119, 0
    %v140 = vand.u32 %v119, 2139095040
    %v141 = vshrl.u32 %v140, 23
    %v142 = vsub.s32 %v141, 127
    %v143 = vand.u32 2147483647, %v119
    %v144 = vand.u32 %v143, 8388607
    %v145 = vor.u32 %v144, 8388608
    %v146 = vsub.s32 0, %v145
    %v147 = vadd.s32 %v142, 1
    %vm148 = vcmp.gt.s32.totalorder %v147, 0
    %v149 = vsel %vm148, %v147, 0
    %v150 = vshrl.u32 %v149, 5
    %v151 = vand.u32 %v149, 31
    %v152 = vsub.s32 32, %v151
    %v153 = vshrl.u32 683565275, %v152
    %v154 = vshll.u32 683565275, %v151
    %v155 = vshrl.u32 2475754826, %v152
    %v156 = vor.u32 %v154, %v155
    %v157 = vshll.u32 2475754826, %v151
    %v158 = vshrl.u32 2131351028, %v152
    %v159 = vor.u32 %v157, %v158
    %v160 = vshll.u32 2131351028, %v151
    %v161 = vshrl.u32 2102212464, %v152
    %v162 = vor.u32 %v160, %v161
    %v163 = vshll.u32 2102212464, %v151
    %v164 = vshrl.u32 920167782, %v152
    %v165 = vor.u32 %v163, %v164
    %v166 = vshll.u32 920167782, %v151
    %v167 = vshrl.u32 1326507024, %v152
    %v168 = vor.u32 %v166, %v167
    %vm169 = vcmp.lt.s32.totalorder %v150, 1
    %vm170 = vcmp.lt.s32.totalorder %v150, 2
    %vm171 = vcmp.lt.s32.totalorder %v150, 3
    %vm172 = vcmp.lt.s32.totalorder %v150, 4
    %v173 = vsel %vm169, %v153, %v156
    %v174 = vsel %vm172, %v162, 2102212464
    %v175 = vsel %vm171, %v159, %v174
    %v176 = vsel %vm170, %v173, %v175
    %v177 = vsel %vm169, %v156, %v159
    %v178 = vsel %vm172, %v165, 920167782
    %v179 = vsel %vm171, %v162, %v178
    %v180 = vsel %vm170, %v177, %v179
    %v181 = vsel %vm169, %v159, %v162
    %v182 = vsel %vm172, %v168, 1326507024
    %v183 = vsel %vm171, %v165, %v182
    %v184 = vsel %vm170, %v181, %v183
    %v185 = vshll.u32 %v145, 8
    %v186 = vmul.u32.u64.compose %v185, %v184
    %v187 = vextract.low.u32 %v186
    %v188 = vextract.high.u32 %v186
    %v189 = vmul.u32.u64.compose %v185, %v180
    %v190 = vextract.low.u32 %v189
    %v191 = vextract.high.u32 %v189
    %v192 = vmul.u32 %v185, %v176
    %v193 = vadd.s32 %v188, %v190
    %vm194 = vc.u32 %v188, %v190
    %v195 = vadd.s32 %v191, 1
    %v196 = vsel %vm194, %v195, %v191
    %v197 = vadd.s32 %v192, %v196
    %v198 = vadd.s32 %v197, 536870912
    %v199 = vshrl.u32 %v198, 30
    %v200 = vshll.u32 %v199, 30
    %v201 = vsub.s32 %v197, %v200
    %vm202 = vcmp.lt.s32.totalorder %v201, 0
    %v203 = vsub.s32 0, %v201
    %v204 = vsel %vm202, %v203, %v201
    %v205 = vclz %v204
    %v206 = vsub.s32 %v205, 2
    %vm207 = vcmp.gt.s32.totalorder 0, %v206
    %v208 = vsel %vm207, 0, %v206
    %v209 = vsub.s32 32, %v208
    %v210 = vshll.u32 %v201, %v208
    %v211 = vshrl.u32 %v193, %v209
    %v212 = vor.u32 %v210, %v211
    %v213 = vsub.s32 4294967266, %v208
    %v214 = vadd.s32 %v213, 127
    %v215 = vshll.u32 %v214, 23
    %v216 = vor.u32 4788187, %v215
    %v217 = vand.u32 2147483647, %v216
    %v219 = vcvt.s32.f32 %v212
    %v220 = vmul.f32 %v219, %v217
    %v221 = vxor.u32 %v220, 2147483648
    %v222 = vsel %vm139, %v221, %v220
    %v223 = vsub.s32 4, %v199
    %v224 = vsel %vm139, %v223, %v199
    %v225 = vsel %vm138, %v119, %v222
    %v226 = vsel %vm138, 0, %v224
    %v227 = vcosq.f32.pop %v225
    %v228 = vsinq.f32.pop %v225
    %vm229 = vweird.f32 %v119
    %v230 = vadd.s32 %v226, 3
    %v231 = vand.u32 %v230, 3
    %vm232 = vcmp.lt.s32.totalorder %v231, 2
    %vm233 = vcmp.eq.s32.totalorder %v231, 0
    %v234 = vxor.u32 %v228, 2147483648
    %v235 = vsel %vm233, %v227, %v234
    %vm236 = vcmp.eq.s32.totalorder %v231, 2
    %v237 = vxor.u32 %v227, 2147483648
    %v238 = vsel %vm236, %v237, %v228
    %v239 = vsel %vm232, %v235, %v238
    %v240 = vsel %vm229, nan, %v239
    %v241 = vand.u32 2147483647, %v124
    %vm242 = vcmp.le.f32.partialorder %v241, 0.7853982
    %vm243 = vcmp.lt.s32.totalorder %v124, 0
    %v244 = vand.u32 %v124, 2139095040
    %v245 = vshrl.u32 %v244, 23
    %v246 = vsub.s32 %v245, 127
    %v247 = vand.u32 2147483647, %v124
    %v248 = vand.u32 %v247, 8388607
    %v249 = vor.u32 %v248, 8388608
    %v250 = vsub.s32 0, %v249
    %v251 = vadd.s32 %v246, 1
    %vm252 = vcmp.gt.s32.totalorder %v251, 0
    %v253 = vsel %vm252, %v251, 0
    %v254 = vshrl.u32 %v253, 5
    %v255 = vand.u32 %v253, 31
    %v256 = vsub.s32 32, %v255
    %v257 = vshrl.u32 683565275, %v256
    %v258 = vshll.u32 683565275, %v255
    %v259 = vshrl.u32 2475754826, %v256
    %v260 = vor.u32 %v258, %v259
    %v261 = vshll.u32 2475754826, %v255
    %v262 = vshrl.u32 2131351028, %v256
    %v263 = vor.u32 %v261, %v262
    %v264 = vshll.u32 2131351028, %v255
    %v265 = vshrl.u32 2102212464, %v256
    %v266 = vor.u32 %v264, %v265
    %v267 = vshll.u32 2102212464, %v255
    %v268 = vshrl.u32 920167782, %v256
    %v269 = vor.u32 %v267, %v268
    %v270 = vshll.u32 920167782, %v255
    %v271 = vshrl.u32 1326507024, %v256
    %v272 = vor.u32 %v270, %v271
    %vm273 = vcmp.lt.s32.totalorder %v254, 1
    %vm274 = vcmp.lt.s32.totalorder %v254, 2
    %vm275 = vcmp.lt.s32.totalorder %v254, 3
    %vm276 = vcmp.lt.s32.totalorder %v254, 4
    %v277 = vsel %vm273, %v257, %v260
    %v278 = vsel %vm276, %v266, 2102212464
    %v279 = vsel %vm275, %v263, %v278
    %v280 = vsel %vm274, %v277, %v279
    %v281 = vsel %vm273, %v260, %v263
    %v282 = vsel %vm276, %v269, 920167782
    %v283 = vsel %vm275, %v266, %v282
    %v284 = vsel %vm274, %v281, %v283
    %v285 = vsel %vm273, %v263, %v266
    %v286 = vsel %vm276, %v272, 1326507024
    %v287 = vsel %vm275, %v269, %v286
    %v288 = vsel %vm274, %v285, %v287
    %v289 = vshll.u32 %v249, 8
    %v290 = vmul.u32.u64.compose %v289, %v288
    %v291 = vextract.low.u32 %v290
    %v292 = vextract.high.u32 %v290
    %v293 = vmul.u32.u64.compose %v289, %v284
    %v294 = vextract.low.u32 %v293
    %v295 = vextract.high.u32 %v293
    %v296 = vmul.u32 %v289, %v280
    %v297 = vadd.s32 %v292, %v294
    %vm298 = vc.u32 %v292, %v294
    %v299 = vadd.s32 %v295, 1
    %v300 = vsel %vm298, %v299, %v295
    %v301 = vadd.s32 %v296, %v300
    %v302 = vadd.s32 %v301, 536870912
    %v303 = vshrl.u32 %v302, 30
    %v304 = vshll.u32 %v303, 30
    %v305 = vsub.s32 %v301, %v304
    %vm306 = vcmp.lt.s32.totalorder %v305, 0
    %v307 = vsub.s32 0, %v305
    %v308 = vsel %vm306, %v307, %v305
    %v309 = vclz %v308
    %v310 = vsub.s32 %v309, 2
    %vm311 = vcmp.gt.s32.totalorder 0, %v310
    %v312 = vsel %vm311, 0, %v310
    %v313 = vsub.s32 32, %v312
    %v314 = vshll.u32 %v305, %v312
    %v315 = vshrl.u32 %v297, %v313
    %v316 = vor.u32 %v314, %v315
    %v317 = vsub.s32 4294967266, %v312
    %v318 = vadd.s32 %v317, 127
    %v319 = vshll.u32 %v318, 23
    %v320 = vor.u32 4788187, %v319
    %v321 = vand.u32 2147483647, %v320
    %v323 = vcvt.s32.f32 %v316
    %v324 = vmul.f32 %v323, %v321
    %v325 = vxor.u32 %v324, 2147483648
    %v326 = vsel %vm243, %v325, %v324
    %v327 = vsub.s32 4, %v303
    %v328 = vsel %vm243, %v327, %v303
    %v329 = vsel %vm242, %v124, %v326
    %v330 = vsel %vm242, 0, %v328
    %v331 = vcosq.f32.pop %v329
    %v332 = vsinq.f32.pop %v329
    %vm333 = vweird.f32 %v124
    %v334 = vadd.s32 %v330, 3
    %v335 = vand.u32 %v334, 3
    %vm336 = vcmp.lt.s32.totalorder %v335, 2
    %vm337 = vcmp.eq.s32.totalorder %v335, 0
    %v338 = vxor.u32 %v332, 2147483648
    %v339 = vsel %vm337, %v331, %v338
    %vm340 = vcmp.eq.s32.totalorder %v335, 2
    %v341 = vxor.u32 %v331, 2147483648
    %v342 = vsel %vm340, %v341, %v332
    %v343 = vsel %vm336, %v339, %v342
    %v344 = vsel %vm333, nan, %v343
    %v345 = vand.u32 2147483647, %v129
    %vm346 = vcmp.le.f32.partialorder %v345, 0.7853982
    %vm347 = vcmp.lt.s32.totalorder %v129, 0
    %v348 = vand.u32 %v129, 2139095040
    %v349 = vshrl.u32 %v348, 23
    %v350 = vsub.s32 %v349, 127
    %v351 = vand.u32 2147483647, %v129
    %v352 = vand.u32 %v351, 8388607
    %v353 = vor.u32 %v352, 8388608
    %v354 = vsub.s32 0, %v353
    %v355 = vadd.s32 %v350, 1
    %vm356 = vcmp.gt.s32.totalorder %v355, 0
    %v357 = vsel %vm356, %v355, 0
    %v358 = vshrl.u32 %v357, 5
    %v359 = vand.u32 %v357, 31
    %v360 = vsub.s32 32, %v359
    %v361 = vshrl.u32 683565275, %v360
    %v362 = vshll.u32 683565275, %v359
    %v363 = vshrl.u32 2475754826, %v360
    %v364 = vor.u32 %v362, %v363
    %v365 = vshll.u32 2475754826, %v359
    %v366 = vshrl.u32 2131351028, %v360
    %v367 = vor.u32 %v365, %v366
    %v368 = vshll.u32 2131351028, %v359
    %v369 = vshrl.u32 2102212464, %v360
    %v370 = vor.u32 %v368, %v369
    %v371 = vshll.u32 2102212464, %v359
    %v372 = vshrl.u32 920167782, %v360
    %v373 = vor.u32 %v371, %v372
    %v374 = vshll.u32 920167782, %v359
    %v375 = vshrl.u32 1326507024, %v360
    %v376 = vor.u32 %v374, %v375
    %vm377 = vcmp.lt.s32.totalorder %v358, 1
    %vm378 = vcmp.lt.s32.totalorder %v358, 2
    %vm379 = vcmp.lt.s32.totalorder %v358, 3
    %vm380 = vcmp.lt.s32.totalorder %v358, 4
    %v381 = vsel %vm377, %v361, %v364
    %v382 = vsel %vm380, %v370, 2102212464
    %v383 = vsel %vm379, %v367, %v382
    %v384 = vsel %vm378, %v381, %v383
    %v385 = vsel %vm377, %v364, %v367
    %v386 = vsel %vm380, %v373, 920167782
    %v387 = vsel %vm379, %v370, %v386
    %v388 = vsel %vm378, %v385, %v387
    %v389 = vsel %vm377, %v367, %v370
    %v390 = vsel %vm380, %v376, 1326507024
    %v391 = vsel %vm379, %v373, %v390
    %v392 = vsel %vm378, %v389, %v391
    %v393 = vshll.u32 %v353, 8
    %v394 = vmul.u32.u64.compose %v393, %v392
    %v395 = vextract.low.u32 %v394
    %v396 = vextract.high.u32 %v394
    %v397 = vmul.u32.u64.compose %v393, %v388
    %v398 = vextract.low.u32 %v397
    %v399 = vextract.high.u32 %v397
    %v400 = vmul.u32 %v393, %v384
    %v401 = vadd.s32 %v396, %v398
    %vm402 = vc.u32 %v396, %v398
    %v403 = vadd.s32 %v399, 1
    %v404 = vsel %vm402, %v403, %v399
    %v405 = vadd.s32 %v400, %v404
    %v406 = vadd.s32 %v405, 536870912
    %v407 = vshrl.u32 %v406, 30
    %v408 = vshll.u32 %v407, 30
    %v409 = vsub.s32 %v405, %v408
    %vm410 = vcmp.lt.s32.totalorder %v409, 0
    %v411 = vsub.s32 0, %v409
    %v412 = vsel %vm410, %v411, %v409
    %v413 = vclz %v412
    %v414 = vsub.s32 %v413, 2
    %vm415 = vcmp.gt.s32.totalorder 0, %v414
    %v416 = vsel %vm415, 0, %v414
    %v417 = vsub.s32 32, %v416
    %v418 = vshll.u32 %v409, %v416
    %v419 = vshrl.u32 %v401, %v417
    %v420 = vor.u32 %v418, %v419
    %v421 = vsub.s32 4294967266, %v416
    %v422 = vadd.s32 %v421, 127
    %v423 = vshll.u32 %v422, 23
    %v424 = vor.u32 4788187, %v423
    %v425 = vand.u32 2147483647, %v424
    %v427 = vcvt.s32.f32 %v420
    %v428 = vmul.f32 %v427, %v425
    %v429 = vxor.u32 %v428, 2147483648
    %v430 = vsel %vm347, %v429, %v428
    %v431 = vsub.s32 4, %v407
    %v432 = vsel %vm347, %v431, %v407
    %v433 = vsel %vm346, %v129, %v430
    %v434 = vsel %vm346, 0, %v432
    %v435 = vcosq.f32.pop %v433
    %v436 = vsinq.f32.pop %v433
    %vm437 = vweird.f32 %v129
    %v438 = vadd.s32 %v434, 3
    %v439 = vand.u32 %v438, 3
    %vm440 = vcmp.lt.s32.totalorder %v439, 2
    %vm441 = vcmp.eq.s32.totalorder %v439, 0
    %v442 = vxor.u32 %v436, 2147483648
    %v443 = vsel %vm441, %v435, %v442
    %vm444 = vcmp.eq.s32.totalorder %v439, 2
    %v445 = vxor.u32 %v435, 2147483648
    %v446 = vsel %vm444, %v445, %v436
    %v447 = vsel %vm440, %v443, %v446
    %v448 = vsel %vm437, nan, %v447
    %v449 = vand.u32 2147483647, %v134
    %vm450 = vcmp.le.f32.partialorder %v449, 0.7853982
    %vm451 = vcmp.lt.s32.totalorder %v134, 0
    %v452 = vand.u32 %v134, 2139095040
    %v453 = vshrl.u32 %v452, 23
    %v454 = vsub.s32 %v453, 127
    %v455 = vand.u32 2147483647, %v134
    %v456 = vand.u32 %v455, 8388607
    %v457 = vor.u32 %v456, 8388608
    %v458 = vsub.s32 0, %v457
    %v459 = vadd.s32 %v454, 1
    %vm460 = vcmp.gt.s32.totalorder %v459, 0
    %v461 = vsel %vm460, %v459, 0
    %v462 = vshrl.u32 %v461, 5
    %v463 = vand.u32 %v461, 31
    %v464 = vsub.s32 32, %v463
    %v465 = vshrl.u32 683565275, %v464
    %v466 = vshll.u32 683565275, %v463
    %v467 = vshrl.u32 2475754826, %v464
    %v468 = vor.u32 %v466, %v467
    %v469 = vshll.u32 2475754826, %v463
    %v470 = vshrl.u32 2131351028, %v464
    %v471 = vor.u32 %v469, %v470
    %v472 = vshll.u32 2131351028, %v463
    %v473 = vshrl.u32 2102212464, %v464
    %v474 = vor.u32 %v472, %v473
    %v475 = vshll.u32 2102212464, %v463
    %v476 = vshrl.u32 920167782, %v464
    %v477 = vor.u32 %v475, %v476
    %v478 = vshll.u32 920167782, %v463
    %v479 = vshrl.u32 1326507024, %v464
    %v480 = vor.u32 %v478, %v479
    %vm481 = vcmp.lt.s32.totalorder %v462, 1
    %vm482 = vcmp.lt.s32.totalorder %v462, 2
    %vm483 = vcmp.lt.s32.totalorder %v462, 3
    %vm484 = vcmp.lt.s32.totalorder %v462, 4
    %v485 = vsel %vm481, %v465, %v468
    %v486 = vsel %vm484, %v474, 2102212464
    %v487 = vsel %vm483, %v471, %v486
    %v488 = vsel %vm482, %v485, %v487
    %v489 = vsel %vm481, %v468, %v471
    %v490 = vsel %vm484, %v477, 920167782
    %v491 = vsel %vm483, %v474, %v490
    %v492 = vsel %vm482, %v489, %v491
    %v493 = vsel %vm481, %v471, %v474
    %v494 = vsel %vm484, %v480, 1326507024
    %v495 = vsel %vm483, %v477, %v494
    %v496 = vsel %vm482, %v493, %v495
    %v497 = vshll.u32 %v457, 8
    %v498 = vmul.u32.u64.compose %v497, %v496
    %v499 = vextract.low.u32 %v498
    %v500 = vextract.high.u32 %v498
    %v501 = vmul.u32.u64.compose %v497, %v492
    %v502 = vextract.low.u32 %v501
    %v503 = vextract.high.u32 %v501
    %v504 = vmul.u32 %v497, %v488
    %v505 = vadd.s32 %v500, %v502
    %vm506 = vc.u32 %v500, %v502
    %v507 = vadd.s32 %v503, 1
    %v508 = vsel %vm506, %v507, %v503
    %v509 = vadd.s32 %v504, %v508
    %v510 = vadd.s32 %v509, 536870912
    %v511 = vshrl.u32 %v510, 30
    %v512 = vshll.u32 %v511, 30
    %v513 = vsub.s32 %v509, %v512
    %vm514 = vcmp.lt.s32.totalorder %v513, 0
    %v515 = vsub.s32 0, %v513
    %v516 = vsel %vm514, %v515, %v513
    %v517 = vclz %v516
    %v518 = vsub.s32 %v517, 2
    %vm519 = vcmp.gt.s32.totalorder 0, %v518
    %v520 = vsel %vm519, 0, %v518
    %v521 = vsub.s32 32, %v520
    %v522 = vshll.u32 %v513, %v520
    %v523 = vshrl.u32 %v505, %v521
    %v524 = vor.u32 %v522, %v523
    %v525 = vsub.s32 4294967266, %v520
    %v526 = vadd.s32 %v525, 127
    %v527 = vshll.u32 %v526, 23
    %v528 = vor.u32 4788187, %v527
    %v529 = vand.u32 2147483647, %v528
    %v531 = vcvt.s32.f32 %v524
    %v532 = vmul.f32 %v531, %v529
    %v533 = vxor.u32 %v532, 2147483648
    %v534 = vsel %vm451, %v533, %v532
    %v535 = vsub.s32 4, %v511
    %v536 = vsel %vm451, %v535, %v511
    %v537 = vsel %vm450, %v134, %v534
    %v538 = vsel %vm450, 0, %v536
    %v539 = vcosq.f32.pop %v537
    %v540 = vsinq.f32.pop %v537
    %vm541 = vweird.f32 %v134
    %v542 = vadd.s32 %v538, 3
    %v543 = vand.u32 %v542, 3
    %vm544 = vcmp.lt.s32.totalorder %v543, 2
    %vm545 = vcmp.eq.s32.totalorder %v543, 0
    %v546 = vxor.u32 %v540, 2147483648
    %v547 = vsel %vm545, %v539, %v546
    %vm548 = vcmp.eq.s32.totalorder %v543, 2
    %v549 = vxor.u32 %v539, 2147483648
    %v550 = vsel %vm548, %v549, %v540
    %v551 = vsel %vm544, %v547, %v550
    %v552 = vsel %vm541, nan, %v551
    %557 = vrot.lane.b32.xlu0 %v119, 64
    %v558 = vpop.permute.xlu0 %557
    %559 = vrot.lane.b32.xlu0 %v124, 64
    %v560 = vpop.permute.xlu0 %559
    %561 = vrot.lane.b32.xlu0 %v129, 64
    %v562 = vpop.permute.xlu0 %561
    %563 = vrot.lane.b32.xlu0 %v134, 64
    %v564 = vpop.permute.xlu0 %563
    %v569 = vadd.f32 %v240, %v558
    %v570 = vadd.f32 %v344, %v560
    %v571 = vadd.f32 %v448, %v562
    %v572 = vadd.f32 %v552, %v564
    %v573 = vld [vmem:[%s2] sm:$0xff]
    %v574 = vld [vmem:[%s2 + $0x8] sm:$0xff]
    %v575 = vld [vmem:[%s2 + $0x10] sm:$0xff]
    %v576 = vld [vmem:[%s2 + $0x18] sm:$0xff]
    %v577 = vld [vmem:[%s2 + $0x20] sm:$0xff]
    %v578 = vld [vmem:[%s2 + $0x28] sm:$0xff]
    %v579 = vld [vmem:[%s2 + $0x30] sm:$0xff]
    %v580 = vld [vmem:[%s2 + $0x38] sm:$0xff]
    %v581 = vld [vmem:[%s3 + $0x8] sm:$0xff]
    %v582 = vld [vmem:[%s3 + $0x10] sm:$0xff]
    %v583 = vld [vmem:[%s3 + $0x18] sm:$0xff]
    %v584 = vld [vmem:[%s3 + $0x20] sm:$0xff]
    %v585 = vld [vmem:[%s3 + $0x28] sm:$0xff]
    %v586 = vld [vmem:[%s3 + $0x30] sm:$0xff]
    %v587 = vld [vmem:[%s3 + $0x38] sm:$0xff]
    %v588 = vld [vmem:[%s3 + $0x40] sm:$0xff]
    %v590 = vsel %vm18, %v569, 0
    %v593 = vsel %vm18, %v570, 0
    %v596 = vsel %vm18, %v571, 0
    %v599 = vsel %vm18, %v572, 0
    %601 = vmatprep.subr.mxu0 0.0
    %602 = vmatpush1.msra.mxu0 %v581
    %603 = vmatprep.subr.mxu0 0.0
    %604 = vmatpush1.msra.mxu0 %v582
    %605 = vmatprep.subr.mxu0 0.0
    %606 = vmatpush1.msra.mxu0 %v583
    %607 = vmatprep.subr.mxu0 0.0
    %608 = vmatpush1.msra.mxu0 %v584
    %609 = vmatprep.subr.mxu0 0.0
    %610 = vmatpush1.msra.mxu0 %v585
    %611 = vmatprep.subr.mxu0 0.0
    %612 = vmatpush1.msra.mxu0 %v586
    %613 = vmatprep.subr.mxu0 0.0
    %614 = vmatpush1.msra.mxu0 %v587
    %615 = vmatprep.subr.mxu0 0.0
    %616 = vmatpush1.msra.mxu0 %v588
    %617 = vmatprep.subr.mxu0 0.0
    %618 = vmatpush1.msra.mxu0 0.0
    %619 = vmatprep.subr.mxu0 0.0
    %620 = vmatpush1.msra.mxu0 0.0
    %621 = vmatprep.subr.mxu0 0.0
    %622 = vmatpush1.msra.mxu0 0.0
    %623 = vmatprep.subr.mxu0 0.0
    %624 = vmatpush1.msra.mxu0 0.0
    %625 = vmatprep.subr.mxu0 0.0
    %626 = vmatpush1.msra.mxu0 0.0
    %627 = vmatprep.subr.mxu0 0.0
    %628 = vmatpush1.msra.mxu0 0.0
    %629 = vmatprep.subr.mxu0 0.0
    %630 = vmatpush1.msra.mxu0 0.0
    %631 = vmatprep.subr.mxu0 0.0
    %632 = vmatpush1.msra.mxu0 0.0
    %633 = vmatprep.subr.mxu0 0.0
    %634 = vmatpush1.msra.mxu0 0.0
    %635 = vmatprep.subr.mxu0 0.0
    %636 = vmatpush1.msra.mxu0 0.0
    %637 = vmatprep.subr.mxu0 0.0
    %638 = vmatpush1.msra.mxu0 0.0
    %639 = vmatprep.subr.mxu0 0.0
    %640 = vmatpush1.msra.mxu0 0.0
    %641 = vmatprep.subr.mxu0 0.0
    %642 = vmatpush1.msra.mxu0 0.0
    %643 = vmatprep.subr.mxu0 0.0
    %644 = vmatpush1.msra.mxu0 0.0
    %645 = vmatprep.subr.mxu0 0.0
    %646 = vmatpush1.msra.mxu0 0.0
    %647 = vmatprep.subr.mxu0 0.0
    %648 = vmatpush1.msra.mxu0 0.0
    %649 = vmatprep.subr.mxu0 0.0
    %650 = vmatpush1.msra.mxu0 0.0
    %651 = vmatprep.subr.mxu0 0.0
    %652 = vmatpush1.msra.mxu0 0.0
    %653 = vmatprep.subr.mxu0 0.0
    %654 = vmatpush1.msra.mxu0 0.0
    %655 = vmatprep.subr.mxu0 0.0
    %656 = vmatpush1.msra.mxu0 0.0
    %657 = vmatprep.subr.mxu0 0.0
    %658 = vmatpush1.msra.mxu0 0.0
    %659 = vmatprep.subr.mxu0 0.0
    %660 = vmatpush1.msra.mxu0 0.0
    %661 = vmatprep.subr.mxu0 0.0
    %662 = vmatpush1.msra.mxu0 0.0
    %663 = vmatprep.subr.mxu0 0.0
    %664 = vmatpush1.msra.mxu0 0.0
    %665 = vmatprep.mubr.f32.mxu0 0.0
    %666 = vmatmul.mubr.f32.gmra.mrb[0].mxu0 %v590
    %v667 = vpop.f32.mrb[0].mxu0
    %v668 = vadd.f32 0.0, %v667
    %v669 = vpop.f32.mrb[0].mxu0
    %670 = vmatprep.mubr.f32.mxu0 0.0
    %671 = vmatmul.mubr.f32.gmra.mrb[0].mxu0 %v593
    %v672 = vpop.f32.mrb[0].mxu0
    %v673 = vadd.f32 0.0, %v672
    %v674 = vpop.f32.mrb[0].mxu0
    %675 = vmatprep.mubr.f32.mxu0 0.0
    %676 = vmatmul.mubr.f32.gmra.mrb[0].mxu0 %v596
    %v677 = vpop.f32.mrb[0].mxu0
    %v678 = vadd.f32 0.0, %v677
    %v679 = vpop.f32.mrb[0].mxu0
    %680 = vmatprep.mubr.f32.mxu0 0.0
    %681 = vmatmul.mubr.f32.gmra.mrb[0].mxu0 %v599
    %v682 = vpop.f32.mrb[0].mxu0
    %v683 = vadd.f32 0.0, %v682
    %v684 = vpop.f32.mrb[0].mxu0
    %685 = vdwg.mxu0
    %v686 = vld [vmem:[%s3 + $0x48] sm:$0xff]
    %v687 = vld [vmem:[%s3 + $0x50] sm:$0xff]
    %v688 = vld [vmem:[%s3 + $0x58] sm:$0xff]
    %v689 = vld [vmem:[%s3 + $0x60] sm:$0xff]
    %v690 = vld [vmem:[%s3 + $0x68] sm:$0xff]
    %v691 = vld [vmem:[%s3 + $0x70] sm:$0xff]
    %v692 = vld [vmem:[%s3 + $0x78] sm:$0xff]
    %v693 = vld [vmem:[%s3 + $0x80] sm:$0xff]
    %v694 = vld [vmem:[%s3 + $0x88] sm:$0xff]
    %v695 = vld [vmem:[%s3 + $0x90] sm:$0xff]
    %v696 = vld [vmem:[%s3 + $0x98] sm:$0xff]
    %v697 = vld [vmem:[%s3 + $0xa0] sm:$0xff]
    %v698 = vld [vmem:[%s3 + $0xa8] sm:$0xff]
    %v699 = vld [vmem:[%s3 + $0xb0] sm:$0xff]
    %v700 = vld [vmem:[%s3 + $0xb8] sm:$0xff]
    %v701 = vld [vmem:[%s3 + $0xc0] sm:$0xff]
    %v703 = vsel %vm18, %v686, 0
    %v706 = vsel %vm18, %v687, 0
    %v709 = vsel %vm18, %v688, 0
    %v712 = vsel %vm18, %v689, 0
    %v715 = vsel %vm18, %v690, 0
    %v718 = vsel %vm18, %v691, 0
    %v721 = vsel %vm18, %v692, 0
    %v724 = vsel %vm18, %v693, 0
    %v727 = vsel %vm18, %v694, 0
    %v730 = vsel %vm18, %v695, 0
    %v733 = vsel %vm18, %v696, 0
    %v736 = vsel %vm18, %v697, 0
    %v739 = vsel %vm18, %v698, 0
    %v742 = vsel %vm18, %v699, 0
    %v745 = vsel %vm18, %v700, 0
    %v748 = vsel %vm18, %v701, 0
    %750 = vmatprep.subr.mxu0 0.0
    %751 = vmatpush1.msra.mxu0 %v573
    %752 = vmatprep.subr.mxu0 0.0
    %753 = vmatpush1.msra.mxu0 %v574
    %754 = vmatprep.subr.mxu0 0.0
    %755 = vmatpush1.msra.mxu0 %v575
    %756 = vmatprep.subr.mxu0 0.0
    %757 = vmatpush1.msra.mxu0 %v576
    %758 = vmatprep.subr.mxu0 0.0
    %759 = vmatpush1.msra.mxu0 %v577
    %760 = vmatprep.subr.mxu0 0.0
    %761 = vmatpush1.msra.mxu0 %v578
    %762 = vmatprep.subr.mxu0 0.0
    %763 = vmatpush1.msra.mxu0 %v579
    %764 = vmatprep.subr.mxu0 0.0
    %765 = vmatpush1.msra.mxu0 %v580
    %766 = vmatprep.subr.mxu0 0.0
    %767 = vmatpush1.msra.mxu0 0.0
    %768 = vmatprep.subr.mxu0 0.0
    %769 = vmatpush1.msra.mxu0 0.0
    %770 = vmatprep.subr.mxu0 0.0
    %771 = vmatpush1.msra.mxu0 0.0
    %772 = vmatprep.subr.mxu0 0.0
    %773 = vmatpush1.msra.mxu0 0.0
    %774 = vmatprep.subr.mxu0 0.0
    %775 = vmatpush1.msra.mxu0 0.0
    %776 = vmatprep.subr.mxu0 0.0
    %777 = vmatpush1.msra.mxu0 0.0
    %778 = vmatprep.subr.mxu0 0.0
    %779 = vmatpush1.msra.mxu0 0.0
    %780 = vmatprep.subr.mxu0 0.0
    %781 = vmatpush1.msra.mxu0 0.0
    %782 = vmatprep.subr.mxu0 0.0
    %783 = vmatpush1.msra.mxu0 0.0
    %784 = vmatprep.subr.mxu0 0.0
    %785 = vmatpush1.msra.mxu0 0.0
    %786 = vmatprep.subr.mxu0 0.0
    %787 = vmatpush1.msra.mxu0 0.0
    %788 = vmatprep.subr.mxu0 0.0
    %789 = vmatpush1.msra.mxu0 0.0
    %790 = vmatprep.subr.mxu0 0.0
    %791 = vmatpush1.msra.mxu0 0.0
    %792 = vmatprep.subr.mxu0 0.0
    %793 = vmatpush1.msra.mxu0 0.0
    %794 = vmatprep.subr.mxu0 0.0
    %795 = vmatpush1.msra.mxu0 0.0
    %796 = vmatprep.subr.mxu0 0.0
    %797 = vmatpush1.msra.mxu0 0.0
    %798 = vmatprep.subr.mxu0 0.0
    %799 = vmatpush1.msra.mxu0 0.0
    %800 = vmatprep.subr.mxu0 0.0
    %801 = vmatpush1.msra.mxu0 0.0
    %802 = vmatprep.subr.mxu0 0.0
    %803 = vmatpush1.msra.mxu0 0.0
    %804 = vmatprep.subr.mxu0 0.0
    %805 = vmatpush1.msra.mxu0 0.0
    %806 = vmatprep.subr.mxu0 0.0
    %807 = vmatpush1.msra.mxu0 0.0
    %808 = vmatprep.subr.mxu0 0.0
    %809 = vmatpush1.msra.mxu0 0.0
    %810 = vmatprep.subr.mxu0 0.0
    %811 = vmatpush1.msra.mxu0 0.0
    %812 = vmatprep.subr.mxu0 0.0
    %813 = vmatpush1.msra.mxu0 0.0
    %814 = vmatprep.mubr.f32.mxu0 0.0
    %815 = vmatmul.mubr.f32.gmra.mrb[0].mxu0 %v703
    %v816 = vpop.f32.mrb[0].mxu0
    %v817 = vadd.f32 0.0, %v816
    %v818 = vpop.f32.mrb[0].mxu0
    %819 = vmatprep.mubr.f32.mxu0 0.0
    %820 = vmatmul.mubr.f32.gmra.mrb[0].mxu0 %v706
    %v821 = vpop.f32.mrb[0].mxu0
    %v822 = vadd.f32 0.0, %v821
    %v823 = vpop.f32.mrb[0].mxu0
    %824 = vmatprep.mubr.f32.mxu0 0.0
    %825 = vmatmul.mubr.f32.gmra.mrb[0].mxu0 %v709
    %v826 = vpop.f32.mrb[0].mxu0
    %v827 = vadd.f32 0.0, %v826
    %v828 = vpop.f32.mrb[0].mxu0
    %829 = vmatprep.mubr.f32.mxu0 0.0
    %830 = vmatmul.mubr.f32.gmra.mrb[0].mxu0 %v712
    %v831 = vpop.f32.mrb[0].mxu0
    %v832 = vadd.f32 0.0, %v831
    %v833 = vpop.f32.mrb[0].mxu0
    %834 = vmatprep.mubr.f32.mxu0 0.0
    %835 = vmatmul.mubr.f32.gmra.mrb[0].mxu0 %v715
    %v836 = vpop.f32.mrb[0].mxu0
    %v837 = vadd.f32 0.0, %v836
    %v838 = vpop.f32.mrb[0].mxu0
    %839 = vmatprep.mubr.f32.mxu0 0.0
    %840 = vmatmul.mubr.f32.gmra.mrb[0].mxu0 %v718
    %v841 = vpop.f32.mrb[0].mxu0
    %v842 = vadd.f32 0.0, %v841
    %v843 = vpop.f32.mrb[0].mxu0
    %844 = vmatprep.mubr.f32.mxu0 0.0
    %845 = vmatmul.mubr.f32.gmra.mrb[0].mxu0 %v721
    %v846 = vpop.f32.mrb[0].mxu0
    %v847 = vadd.f32 0.0, %v846
    %v848 = vpop.f32.mrb[0].mxu0
    %849 = vmatprep.mubr.f32.mxu0 0.0
    %850 = vmatmul.mubr.f32.gmra.mrb[0].mxu0 %v724
    %v851 = vpop.f32.mrb[0].mxu0
    %v852 = vadd.f32 0.0, %v851
    %v853 = vpop.f32.mrb[0].mxu0
    %854 = vmatprep.mubr.f32.mxu0 0.0
    %855 = vmatmul.mubr.f32.gmra.mrb[0].mxu0 %v727
    %v856 = vpop.f32.mrb[0].mxu0
    %v857 = vadd.f32 0.0, %v856
    %v858 = vpop.f32.mrb[0].mxu0
    %859 = vmatprep.mubr.f32.mxu0 0.0
    %860 = vmatmul.mubr.f32.gmra.mrb[0].mxu0 %v730
    %v861 = vpop.f32.mrb[0].mxu0
    %v862 = vadd.f32 0.0, %v861
    %v863 = vpop.f32.mrb[0].mxu0
    %864 = vmatprep.mubr.f32.mxu0 0.0
    %865 = vmatmul.mubr.f32.gmra.mrb[0].mxu0 %v733
    %v866 = vpop.f32.mrb[0].mxu0
    %v867 = vadd.f32 0.0, %v866
    %v868 = vpop.f32.mrb[0].mxu0
    %869 = vmatprep.mubr.f32.mxu0 0.0
    %870 = vmatmul.mubr.f32.gmra.mrb[0].mxu0 %v736
    %v871 = vpop.f32.mrb[0].mxu0
    %v872 = vadd.f32 0.0, %v871
    %v873 = vpop.f32.mrb[0].mxu0
    %874 = vmatprep.mubr.f32.mxu0 0.0
    %875 = vmatmul.mubr.f32.gmra.mrb[0].mxu0 %v739
    %v876 = vpop.f32.mrb[0].mxu0
    %v877 = vadd.f32 0.0, %v876
    %v878 = vpop.f32.mrb[0].mxu0
    %879 = vmatprep.mubr.f32.mxu0 0.0
    %880 = vmatmul.mubr.f32.gmra.mrb[0].mxu0 %v742
    %v881 = vpop.f32.mrb[0].mxu0
    %v882 = vadd.f32 0.0, %v881
    %v883 = vpop.f32.mrb[0].mxu0
    %884 = vmatprep.mubr.f32.mxu0 0.0
    %885 = vmatmul.mubr.f32.gmra.mrb[0].mxu0 %v745
    %v886 = vpop.f32.mrb[0].mxu0
    %v887 = vadd.f32 0.0, %v886
    %v888 = vpop.f32.mrb[0].mxu0
    %889 = vmatprep.mubr.f32.mxu0 0.0
    %890 = vmatmul.mubr.f32.gmra.mrb[0].mxu0 %v748
    %v891 = vpop.f32.mrb[0].mxu0
    %v892 = vadd.f32 0.0, %v891
    %v893 = vpop.f32.mrb[0].mxu0
    %894 = vdwg.mxu0
    %v895 = vld [vmem:[%s3 + $0xc8] sm:$0xff]
    %v896 = vld [vmem:[%s3 + $0xd0] sm:$0xff]
    %v897 = vld [vmem:[%s3 + $0xd8] sm:$0xff]
    %v898 = vld [vmem:[%s3 + $0xe0] sm:$0xff]
    %v899 = vld [vmem:[%s3 + $0xe8] sm:$0xff]
    %v900 = vld [vmem:[%s3 + $0xf0] sm:$0xff]
    %v901 = vld [vmem:[%s3 + $0xf8] sm:$0xff]
    %v902 = vld [vmem:[%s3 + $0x100] sm:$0xff]
    %v903 = vadd.f32 %v817, %v895
    %v904 = vadd.f32 %v822, %v896
    %v905 = vadd.f32 %v827, %v897
    %v906 = vadd.f32 %v832, %v898
    %v907 = vadd.f32 %v837, %v899
    %v908 = vadd.f32 %v842, %v900
    %v909 = vadd.f32 %v847, %v901
    %v910 = vadd.f32 %v852, %v902
    %v912 = vsel %vm18, %v668, 0
    %v915 = vsel %vm18, %v673, 0
    %v918 = vsel %vm18, %v678, 0
    %v921 = vsel %vm18, %v683, 0
    %923 = vmatprep.subr.mxu0 0.0
    %924 = vmatpush1.msra.mxu0 %v903
    %925 = vmatprep.subr.mxu0 0.0
    %926 = vmatpush1.msra.mxu0 %v904
    %927 = vmatprep.subr.mxu0 0.0
    %928 = vmatpush1.msra.mxu0 %v905
    %929 = vmatprep.subr.mxu0 0.0
    %930 = vmatpush1.msra.mxu0 %v906
    %931 = vmatprep.subr.mxu0 0.0
    %932 = vmatpush1.msra.mxu0 %v907
    %933 = vmatprep.subr.mxu0 0.0
    %934 = vmatpush1.msra.mxu0 %v908
    %935 = vmatprep.subr.mxu0 0.0
    %936 = vmatpush1.msra.mxu0 %v909
    %937 = vmatprep.subr.mxu0 0.0
    %938 = vmatpush1.msra.mxu0 %v910
    %939 = vmatprep.subr.mxu0 0.0
    %940 = vmatpush1.msra.mxu0 0.0
    %941 = vmatprep.subr.mxu0 0.0
    %942 = vmatpush1.msra.mxu0 0.0
    %943 = vmatprep.subr.mxu0 0.0
    %944 = vmatpush1.msra.mxu0 0.0
    %945 = vmatprep.subr.mxu0 0.0
    %946 = vmatpush1.msra.mxu0 0.0
    %947 = vmatprep.subr.mxu0 0.0
    %948 = vmatpush1.msra.mxu0 0.0
    %949 = vmatprep.subr.mxu0 0.0
    %950 = vmatpush1.msra.mxu0 0.0
    %951 = vmatprep.subr.mxu0 0.0
    %952 = vmatpush1.msra.mxu0 0.0
    %953 = vmatprep.subr.mxu0 0.0
    %954 = vmatpush1.msra.mxu0 0.0
    %955 = vmatprep.subr.mxu0 0.0
    %956 = vmatpush1.msra.mxu0 0.0
    %957 = vmatprep.subr.mxu0 0.0
    %958 = vmatpush1.msra.mxu0 0.0
    %959 = vmatprep.subr.mxu0 0.0
    %960 = vmatpush1.msra.mxu0 0.0
    %961 = vmatprep.subr.mxu0 0.0
    %962 = vmatpush1.msra.mxu0 0.0
    %963 = vmatprep.subr.mxu0 0.0
    %964 = vmatpush1.msra.mxu0 0.0
    %965 = vmatprep.subr.mxu0 0.0
    %966 = vmatpush1.msra.mxu0 0.0
    %967 = vmatprep.subr.mxu0 0.0
    %968 = vmatpush1.msra.mxu0 0.0
    %969 = vmatprep.subr.mxu0 0.0
    %970 = vmatpush1.msra.mxu0 0.0
    %971 = vmatprep.subr.mxu0 0.0
    %972 = vmatpush1.msra.mxu0 0.0
    %973 = vmatprep.subr.mxu0 0.0
    %974 = vmatpush1.msra.mxu0 0.0
    %975 = vmatprep.subr.mxu0 0.0
    %976 = vmatpush1.msra.mxu0 0.0
    %977 = vmatprep.subr.mxu0 0.0
    %978 = vmatpush1.msra.mxu0 0.0
    %979 = vmatprep.subr.mxu0 0.0
    %980 = vmatpush1.msra.mxu0 0.0
    %981 = vmatprep.subr.mxu0 0.0
    %982 = vmatpush1.msra.mxu0 0.0
    %983 = vmatprep.subr.mxu0 0.0
    %984 = vmatpush1.msra.mxu0 0.0
    %985 = vmatprep.subr.mxu0 0.0
    %986 = vmatpush1.msra.mxu0 0.0
    %987 = vmatprep.mubr.f32.mxu0 0.0
    %988 = vmatmul.mubr.f32.gmra.mrb[0].mxu0 %v912
    %v989 = vpop.f32.mrb[0].mxu0
    %v990 = vadd.f32 0.0, %v989
    %v991 = vpop.f32.mrb[0].mxu0
    %992 = vmatprep.mubr.f32.mxu0 0.0
    %993 = vmatmul.mubr.f32.gmra.mrb[0].mxu0 %v915
    %v994 = vpop.f32.mrb[0].mxu0
    %v995 = vadd.f32 0.0, %v994
    %v996 = vpop.f32.mrb[0].mxu0
    %997 = vmatprep.mubr.f32.mxu0 0.0
    %998 = vmatmul.mubr.f32.gmra.mrb[0].mxu0 %v918
    %v999 = vpop.f32.mrb[0].mxu0
    %v1000 = vadd.f32 0.0, %v999
    %v1001 = vpop.f32.mrb[0].mxu0
    %1002 = vmatprep.mubr.f32.mxu0 0.0
    %1003 = vmatmul.mubr.f32.gmra.mrb[0].mxu0 %v921
    %v1004 = vpop.f32.mrb[0].mxu0
    %v1005 = vadd.f32 0.0, %v1004
    %v1006 = vpop.f32.mrb[0].mxu0
    %1007 = vdwg.mxu0
    %v1008 = vsel %vm18, %v990, -inf
    %1009 = vmax.xlane.f32.xlu0 %v1008
    %v1010 = vpop.xlane.xlu0 %1009
    %v1011 = vsel %vm18, %v995, -inf
    %1012 = vmax.xlane.f32.xlu0 %v1011
    %v1013 = vpop.xlane.xlu0 %1012
    %v1014 = vsel %vm18, %v1000, -inf
    %1015 = vmax.xlane.f32.xlu0 %v1014
    %v1016 = vpop.xlane.xlu0 %1015
    %v1017 = vsel %vm18, %v1005, -inf
    %1018 = vmax.xlane.f32.xlu0 %v1017
    %v1019 = vpop.xlane.xlu0 %1018
    %v1020 = vsub.f32 %v990, %v1010
    %v1021 = vsub.f32 %v995, %v1013
    %v1022 = vsub.f32 %v1000, %v1016
    %v1023 = vsub.f32 %v1005, %v1019
    %v1024 = vmul.f32 %v1020, 1.442695
    %v1025 = vpow.pop %v1024
    %v1026 = vmul.f32 %v1021, 1.442695
    %v1027 = vpow.pop %v1026
    %v1028 = vmul.f32 %v1022, 1.442695
    %v1029 = vpow.pop %v1028
    %v1030 = vmul.f32 %v1023, 1.442695
    %v1031 = vpow.pop %v1030
    %v1032 = vsel %vm18, %v1025, 0.0
    %1033 = vadd.xlane.f32.xlu0 %v1032
    %v1034 = vpop.xlane.xlu0 %1033
    %v1035 = vsel %vm18, %v1027, 0.0
    %1036 = vadd.xlane.f32.xlu0 %v1035
    %v1037 = vpop.xlane.xlu0 %1036
    %v1038 = vsel %vm18, %v1029, 0.0
    %1039 = vadd.xlane.f32.xlu0 %v1038
    %v1040 = vpop.xlane.xlu0 %1039
    %v1041 = vsel %vm18, %v1031, 0.0
    %1042 = vadd.xlane.f32.xlu0 %v1041
    %v1043 = vpop.xlane.xlu0 %1042
    %v1045 = vsel %vm18, %v1025, 0
    %v1048 = vsel %vm18, %v1027, 0
    %v1051 = vsel %vm18, %v1029, 0
    %v1054 = vsel %vm18, %v1031, 0
    %v1057 = vsel %vm18, %v857, 0
    %v1060 = vsel %vm18, %v862, 0
    %v1063 = vsel %vm18, %v867, 0
    %v1066 = vsel %vm18, %v872, 0
    %v1069 = vsel %vm18, %v877, 0
    %v1072 = vsel %vm18, %v882, 0
    %v1075 = vsel %vm18, %v887, 0
    %v1078 = vsel %vm18, %v892, 0
    %1080 = vmatprep.subr.mxu0 0.0
    %1081 = vmatpush1.xpose.msra.mxu0 %v1057
    %1082 = vmatprep.subr.mxu0 0.0
    %1083 = vmatpush1.xpose.msra.mxu0 %v1060
    %1084 = vmatprep.subr.mxu0 0.0
    %1085 = vmatpush1.xpose.msra.mxu0 %v1063
    %1086 = vmatprep.subr.mxu0 0.0
    %1087 = vmatpush1.xpose.msra.mxu0 %v1066
    %1088 = vmatprep.subr.mxu0 0.0
    %1089 = vmatpush1.xpose.msra.mxu0 %v1069
    %1090 = vmatprep.subr.mxu0 0.0
    %1091 = vmatpush1.xpose.msra.mxu0 %v1072
    %1092 = vmatprep.subr.mxu0 0.0
    %1093 = vmatpush1.xpose.msra.mxu0 %v1075
    %1094 = vmatprep.subr.mxu0 0.0
    %1095 = vmatpush1.xpose.msra.mxu0 %v1078
    %1096 = vmatprep.subr.mxu0 0.0
    %1097 = vmatpush1.xpose.msra.mxu0 0.0
    %1098 = vmatprep.subr.mxu0 0.0
    %1099 = vmatpush1.xpose.msra.mxu0 0.0
    %1100 = vmatprep.subr.mxu0 0.0
    %1101 = vmatpush1.xpose.msra.mxu0 0.0
    %1102 = vmatprep.subr.mxu0 0.0
    %1103 = vmatpush1.xpose.msra.mxu0 0.0
    %1104 = vmatprep.subr.mxu0 0.0
    %1105 = vmatpush1.xpose.msra.mxu0 0.0
    %1106 = vmatprep.subr.mxu0 0.0
    %1107 = vmatpush1.xpose.msra.mxu0 0.0
    %1108 = vmatprep.subr.mxu0 0.0
    %1109 = vmatpush1.xpose.msra.mxu0 0.0
    %1110 = vmatprep.subr.mxu0 0.0
    %1111 = vmatpush1.xpose.msra.mxu0 0.0
    %1112 = vmatprep.subr.mxu0 0.0
    %1113 = vmatpush1.xpose.msra.mxu0 0.0
    %1114 = vmatprep.subr.mxu0 0.0
    %1115 = vmatpush1.xpose.msra.mxu0 0.0
    %1116 = vmatprep.subr.mxu0 0.0
    %1117 = vmatpush1.xpose.msra.mxu0 0.0
    %1118 = vmatprep.subr.mxu0 0.0
    %1119 = vmatpush1.xpose.msra.mxu0 0.0
    %1120 = vmatprep.subr.mxu0 0.0
    %1121 = vmatpush1.xpose.msra.mxu0 0.0
    %1122 = vmatprep.subr.mxu0 0.0
    %1123 = vmatpush1.xpose.msra.mxu0 0.0
    %1124 = vmatprep.subr.mxu0 0.0
    %1125 = vmatpush1.xpose.msra.mxu0 0.0
    %1126 = vmatprep.subr.mxu0 0.0
    %1127 = vmatpush1.xpose.msra.mxu0 0.0
    %1128 = vmatprep.subr.mxu0 0.0
    %1129 = vmatpush1.xpose.msra.mxu0 0.0
    %1130 = vmatprep.subr.mxu0 0.0
    %1131 = vmatpush1.xpose.msra.mxu0 0.0
    %1132 = vmatprep.subr.mxu0 0.0
    %1133 = vmatpush1.xpose.msra.mxu0 0.0
    %1134 = vmatprep.subr.mxu0 0.0
    %1135 = vmatpush1.xpose.msra.mxu0 0.0
    %1136 = vmatprep.subr.mxu0 0.0
    %1137 = vmatpush1.xpose.msra.mxu0 0.0
    %1138 = vmatprep.subr.mxu0 0.0
    %1139 = vmatpush1.xpose.msra.mxu0 0.0
    %1140 = vmatprep.subr.mxu0 0.0
    %1141 = vmatpush1.xpose.msra.mxu0 0.0
    %1142 = vmatprep.subr.mxu0 0.0
    %1143 = vmatpush1.xpose.msra.mxu0 0.0
    %1144 = vmatprep.mubr.f32.mxu0 0.0
    %1145 = vmatmul.mubr.f32.gmra.mrb[0].mxu0 %v1045
    %v1146 = vpop.f32.mrb[0].mxu0
    %v1147 = vadd.f32 0.0, %v1146
    %v1148 = vpop.f32.mrb[0].mxu0
    %1149 = vmatprep.mubr.f32.mxu0 0.0
    %1150 = vmatmul.mubr.f32.gmra.mrb[0].mxu0 %v1048
    %v1151 = vpop.f32.mrb[0].mxu0
    %v1152 = vadd.f32 0.0, %v1151
    %v1153 = vpop.f32.mrb[0].mxu0
    %1154 = vmatprep.mubr.f32.mxu0 0.0
    %1155 = vmatmul.mubr.f32.gmra.mrb[0].mxu0 %v1051
    %v1156 = vpop.f32.mrb[0].mxu0
    %v1157 = vadd.f32 0.0, %v1156
    %v1158 = vpop.f32.mrb[0].mxu0
    %1159 = vmatprep.mubr.f32.mxu0 0.0
    %1160 = vmatmul.mubr.f32.gmra.mrb[0].mxu0 %v1054
    %v1161 = vpop.f32.mrb[0].mxu0
    %v1162 = vadd.f32 0.0, %v1161
    %v1163 = vpop.f32.mrb[0].mxu0
    %1164 = vdwg.mxu0
    %v1165 = vrcp.pop %v1034
    %v1166 = vmul.f32 %v1147, %v1165
    %v1167 = vrcp.pop %v1037
    %v1168 = vmul.f32 %v1152, %v1167
    %v1169 = vrcp.pop %v1040
    %v1170 = vmul.f32 %v1157, %v1169
    %v1171 = vrcp.pop %v1043
    %v1172 = vmul.f32 %v1162, %v1171
    %1181 = vrot.lane.b32.xlu0 %v581, 64
    %v1182 = vpop.permute.xlu0 %1181
    %1183 = vrot.lane.b32.xlu0 %v582, 64
    %v1184 = vpop.permute.xlu0 %1183
    %1185 = vrot.lane.b32.xlu0 %v583, 64
    %v1186 = vpop.permute.xlu0 %1185
    %1187 = vrot.lane.b32.xlu0 %v584, 64
    %v1188 = vpop.permute.xlu0 %1187
    %1189 = vrot.lane.b32.xlu0 %v585, 64
    %v1190 = vpop.permute.xlu0 %1189
    %1191 = vrot.lane.b32.xlu0 %v586, 64
    %v1192 = vpop.permute.xlu0 %1191
    %1193 = vrot.lane.b32.xlu0 %v587, 64
    %v1194 = vpop.permute.xlu0 %1193
    %1195 = vrot.lane.b32.xlu0 %v588, 64
    %v1196 = vpop.permute.xlu0 %1195
    %v1206 = vsel %vm18, %v1166, 0
    %v1209 = vsel %vm18, %v1168, 0
    %v1212 = vsel %vm18, %v1170, 0
    %v1215 = vsel %vm18, %v1172, 0
    %1217 = vmatprep.subr.mxu0 0.0
    %1218 = vmatpush1.msra.mxu0 %v1182
    %1219 = vmatprep.subr.mxu0 0.0
    %1220 = vmatpush1.msra.mxu0 %v1184
    %1221 = vmatprep.subr.mxu0 0.0
    %1222 = vmatpush1.msra.mxu0 %v1186
    %1223 = vmatprep.subr.mxu0 0.0
    %1224 = vmatpush1.msra.mxu0 %v1188
    %1225 = vmatprep.subr.mxu0 0.0
    %1226 = vmatpush1.msra.mxu0 %v1190
    %1227 = vmatprep.subr.mxu0 0.0
    %1228 = vmatpush1.msra.mxu0 %v1192
    %1229 = vmatprep.subr.mxu0 0.0
    %1230 = vmatpush1.msra.mxu0 %v1194
    %1231 = vmatprep.subr.mxu0 0.0
    %1232 = vmatpush1.msra.mxu0 %v1196
    %1233 = vmatprep.subr.mxu0 0.0
    %1234 = vmatpush1.msra.mxu0 0.0
    %1235 = vmatprep.subr.mxu0 0.0
    %1236 = vmatpush1.msra.mxu0 0.0
    %1237 = vmatprep.subr.mxu0 0.0
    %1238 = vmatpush1.msra.mxu0 0.0
    %1239 = vmatprep.subr.mxu0 0.0
    %1240 = vmatpush1.msra.mxu0 0.0
    %1241 = vmatprep.subr.mxu0 0.0
    %1242 = vmatpush1.msra.mxu0 0.0
    %1243 = vmatprep.subr.mxu0 0.0
    %1244 = vmatpush1.msra.mxu0 0.0
    %1245 = vmatprep.subr.mxu0 0.0
    %1246 = vmatpush1.msra.mxu0 0.0
    %1247 = vmatprep.subr.mxu0 0.0
    %1248 = vmatpush1.msra.mxu0 0.0
    %1249 = vmatprep.subr.mxu0 0.0
    %1250 = vmatpush1.msra.mxu0 0.0
    %1251 = vmatprep.subr.mxu0 0.0
    %1252 = vmatpush1.msra.mxu0 0.0
    %1253 = vmatprep.subr.mxu0 0.0
    %1254 = vmatpush1.msra.mxu0 0.0
    %1255 = vmatprep.subr.mxu0 0.0
    %1256 = vmatpush1.msra.mxu0 0.0
    %1257 = vmatprep.subr.mxu0 0.0
    %1258 = vmatpush1.msra.mxu0 0.0
    %1259 = vmatprep.subr.mxu0 0.0
    %1260 = vmatpush1.msra.mxu0 0.0
    %1261 = vmatprep.subr.mxu0 0.0
    %1262 = vmatpush1.msra.mxu0 0.0
    %1263 = vmatprep.subr.mxu0 0.0
    %1264 = vmatpush1.msra.mxu0 0.0
    %1265 = vmatprep.subr.mxu0 0.0
    %1266 = vmatpush1.msra.mxu0 0.0
    %1267 = vmatprep.subr.mxu0 0.0
    %1268 = vmatpush1.msra.mxu0 0.0
    %1269 = vmatprep.subr.mxu0 0.0
    %1270 = vmatpush1.msra.mxu0 0.0
    %1271 = vmatprep.subr.mxu0 0.0
    %1272 = vmatpush1.msra.mxu0 0.0
    %1273 = vmatprep.subr.mxu0 0.0
    %1274 = vmatpush1.msra.mxu0 0.0
    %1275 = vmatprep.subr.mxu0 0.0
    %1276 = vmatpush1.msra.mxu0 0.0
    %1277 = vmatprep.subr.mxu0 0.0
    %1278 = vmatpush1.msra.mxu0 0.0
    %1279 = vmatprep.subr.mxu0 0.0
    %1280 = vmatpush1.msra.mxu0 0.0
    %1281 = vmatprep.mubr.f32.mxu0 0.0
    %1282 = vmatmul.mubr.f32.gmra.mrb[0].mxu0 %v1206
    %v1283 = vpop.f32.mrb[0].mxu0
    %v1284 = vadd.f32 0.0, %v1283
    %v1285 = vpop.f32.mrb[0].mxu0
    %1286 = vmatprep.mubr.f32.mxu0 0.0
    %1287 = vmatmul.mubr.f32.gmra.mrb[0].mxu0 %v1209
    %v1288 = vpop.f32.mrb[0].mxu0
    %v1289 = vpop.f32.mrb[0].mxu0
    %1290 = vmatprep.mubr.f32.mxu0 0.0
    %1291 = vmatmul.mubr.f32.gmra.mrb[0].mxu0 %v1212
    %v1292 = vpop.f32.mrb[0].mxu0
    %v1293 = vpop.f32.mrb[0].mxu0
    %1294 = vmatprep.mubr.f32.mxu0 0.0
    %1295 = vmatmul.mubr.f32.gmra.mrb[0].mxu0 %v1215
    %v1296 = vpop.f32.mrb[0].mxu0
    %v1297 = vpop.f32.mrb[0].mxu0
    %1298 = vdwg.mxu0
    %v1299 = vadd.f32 %v569, %v1284
    %v1300 = vld [vmem:[%s3 + $0x108] sm:$0xff]
    %v1301 = vld [vmem:[%s3 + $0x110] sm:$0xff]
    %v1302 = vld [vmem:[%s3 + $0x118] sm:$0xff]
    %v1303 = vld [vmem:[%s3 + $0x120] sm:$0xff]
    %v1304 = vld [vmem:[%s3 + $0x128] sm:$0xff]
    %v1305 = vld [vmem:[%s3 + $0x130] sm:$0xff]
    %v1306 = vld [vmem:[%s3 + $0x138] sm:$0xff]
    %v1307 = vld [vmem:[%s3 + $0x140] sm:$0xff]
    %v1309 = vsel %vm18, %v1299, 0
    %1311 = vmatprep.subr.mxu0 0.0
    %1312 = vmatpush1.msra.mxu0 %v1300
    %1313 = vmatprep.subr.mxu0 0.0
    %1314 = vmatpush1.msra.mxu0 %v1301
    %1315 = vmatprep.subr.mxu0 0.0
    %1316 = vmatpush1.msra.mxu0 %v1302
    %1317 = vmatprep.subr.mxu0 0.0
    %1318 = vmatpush1.msra.mxu0 %v1303
    %1319 = vmatprep.subr.mxu0 0.0
    %1320 = vmatpush1.msra.mxu0 %v1304
    %1321 = vmatprep.subr.mxu0 0.0
    %1322 = vmatpush1.msra.mxu0 %v1305
    %1323 = vmatprep.subr.mxu0 0.0
    %1324 = vmatpush1.msra.mxu0 %v1306
    %1325 = vmatprep.subr.mxu0 0.0
    %1326 = vmatpush1.msra.mxu0 %v1307
    %1327 = vmatprep.subr.mxu0 0.0
    %1328 = vmatpush1.msra.mxu0 0.0
    %1329 = vmatprep.subr.mxu0 0.0
    %1330 = vmatpush1.msra.mxu0 0.0
    %1331 = vmatprep.subr.mxu0 0.0
    %1332 = vmatpush1.msra.mxu0 0.0
    %1333 = vmatprep.subr.mxu0 0.0
    %1334 = vmatpush1.msra.mxu0 0.0
    %1335 = vmatprep.subr.mxu0 0.0
    %1336 = vmatpush1.msra.mxu0 0.0
    %1337 = vmatprep.subr.mxu0 0.0
    %1338 = vmatpush1.msra.mxu0 0.0
    %1339 = vmatprep.subr.mxu0 0.0
    %1340 = vmatpush1.msra.mxu0 0.0
    %1341 = vmatprep.subr.mxu0 0.0
    %1342 = vmatpush1.msra.mxu0 0.0
    %1343 = vmatprep.subr.mxu0 0.0
    %1344 = vmatpush1.msra.mxu0 0.0
    %1345 = vmatprep.subr.mxu0 0.0
    %1346 = vmatpush1.msra.mxu0 0.0
    %1347 = vmatprep.subr.mxu0 0.0
    %1348 = vmatpush1.msra.mxu0 0.0
    %1349 = vmatprep.subr.mxu0 0.0
    %1350 = vmatpush1.msra.mxu0 0.0
    %1351 = vmatprep.subr.mxu0 0.0
    %1352 = vmatpush1.msra.mxu0 0.0
    %1353 = vmatprep.subr.mxu0 0.0
    %1354 = vmatpush1.msra.mxu0 0.0
    %1355 = vmatprep.subr.mxu0 0.0
    %1356 = vmatpush1.msra.mxu0 0.0
    %1357 = vmatprep.subr.mxu0 0.0
    %1358 = vmatpush1.msra.mxu0 0.0
    %1359 = vmatprep.subr.mxu0 0.0
    %1360 = vmatpush1.msra.mxu0 0.0
    %1361 = vmatprep.subr.mxu0 0.0
    %1362 = vmatpush1.msra.mxu0 0.0
    %1363 = vmatprep.subr.mxu0 0.0
    %1364 = vmatpush1.msra.mxu0 0.0
    %1365 = vmatprep.subr.mxu0 0.0
    %1366 = vmatpush1.msra.mxu0 0.0
    %1367 = vmatprep.subr.mxu0 0.0
    %1368 = vmatpush1.msra.mxu0 0.0
    %1369 = vmatprep.subr.mxu0 0.0
    %1370 = vmatpush1.msra.mxu0 0.0
    %1371 = vmatprep.subr.mxu0 0.0
    %1372 = vmatpush1.msra.mxu0 0.0
    %1373 = vmatprep.subr.mxu0 0.0
    %1374 = vmatpush1.msra.mxu0 0.0
    %1375 = vmatprep.mubr.f32.mxu0 0.0
    %1376 = vmatmul.mubr.f32.gmra.mrb[0].mxu0 %v1309
    %v1377 = vpop.f32.mrb[0].mxu0
    %v1378 = vadd.f32 0.0, %v1377
    %v1379 = vpop.f32.mrb[0].mxu0
    %1380 = vdwg.mxu0
    %v1381 = vmax.f32 %v1378, 0.0
    %1390 = vrot.lane.b32.xlu0 %v1300, 64
    %v1391 = vpop.permute.xlu0 %1390
    %1392 = vrot.lane.b32.xlu0 %v1301, 64
    %v1393 = vpop.permute.xlu0 %1392
    %1394 = vrot.lane.b32.xlu0 %v1302, 64
    %v1395 = vpop.permute.xlu0 %1394
    %1396 = vrot.lane.b32.xlu0 %v1303, 64
    %v1397 = vpop.permute.xlu0 %1396
    %1398 = vrot.lane.b32.xlu0 %v1304, 64
    %v1399 = vpop.permute.xlu0 %1398
    %1400 = vrot.lane.b32.xlu0 %v1305, 64
    %v1401 = vpop.permute.xlu0 %1400
    %1402 = vrot.lane.b32.xlu0 %v1306, 64
    %v1403 = vpop.permute.xlu0 %1402
    %1404 = vrot.lane.b32.xlu0 %v1307, 64
    %v1405 = vpop.permute.xlu0 %1404
    %v1415 = vsel %vm18, %v1381, 0
    %1417 = vmatprep.subr.mxu0 0.0
    %1418 = vmatpush1.msra.mxu0 %v1391
    %1419 = vmatprep.subr.mxu0 0.0
    %1420 = vmatpush1.msra.mxu0 %v1393
    %1421 = vmatprep.subr.mxu0 0.0
    %1422 = vmatpush1.msra.mxu0 %v1395
    %1423 = vmatprep.subr.mxu0 0.0
    %1424 = vmatpush1.msra.mxu0 %v1397
    %1425 = vmatprep.subr.mxu0 0.0
    %1426 = vmatpush1.msra.mxu0 %v1399
    %1427 = vmatprep.subr.mxu0 0.0
    %1428 = vmatpush1.msra.mxu0 %v1401
    %1429 = vmatprep.subr.mxu0 0.0
    %1430 = vmatpush1.msra.mxu0 %v1403
    %1431 = vmatprep.subr.mxu0 0.0
    %1432 = vmatpush1.msra.mxu0 %v1405
    %1433 = vmatprep.subr.mxu0 0.0
    %1434 = vmatpush1.msra.mxu0 0.0
    %1435 = vmatprep.subr.mxu0 0.0
    %1436 = vmatpush1.msra.mxu0 0.0
    %1437 = vmatprep.subr.mxu0 0.0
    %1438 = vmatpush1.msra.mxu0 0.0
    %1439 = vmatprep.subr.mxu0 0.0
    %1440 = vmatpush1.msra.mxu0 0.0
    %1441 = vmatprep.subr.mxu0 0.0
    %1442 = vmatpush1.msra.mxu0 0.0
    %1443 = vmatprep.subr.mxu0 0.0
    %1444 = vmatpush1.msra.mxu0 0.0
    %1445 = vmatprep.subr.mxu0 0.0
    %1446 = vmatpush1.msra.mxu0 0.0
    %1447 = vmatprep.subr.mxu0 0.0
    %1448 = vmatpush1.msra.mxu0 0.0
    %1449 = vmatprep.subr.mxu0 0.0
    %1450 = vmatpush1.msra.mxu0 0.0
    %1451 = vmatprep.subr.mxu0 0.0
    %1452 = vmatpush1.msra.mxu0 0.0
    %1453 = vmatprep.subr.mxu0 0.0
    %1454 = vmatpush1.msra.mxu0 0.0
    %1455 = vmatprep.subr.mxu0 0.0
    %1456 = vmatpush1.msra.mxu0 0.0
    %1457 = vmatprep.subr.mxu0 0.0
    %1458 = vmatpush1.msra.mxu0 0.0
    %1459 = vmatprep.subr.mxu0 0.0
    %1460 = vmatpush1.msra.mxu0 0.0
    %1461 = vmatprep.subr.mxu0 0.0
    %1462 = vmatpush1.msra.mxu0 0.0
    %1463 = vmatprep.subr.mxu0 0.0
    %1464 = vmatpush1.msra.mxu0 0.0
    %1465 = vmatprep.subr.mxu0 0.0
    %1466 = vmatpush1.msra.mxu0 0.0
    %1467 = vmatprep.subr.mxu0 0.0
    %1468 = vmatpush1.msra.mxu0 0.0
    %1469 = vmatprep.subr.mxu0 0.0
    %1470 = vmatpush1.msra.mxu0 0.0
    %1471 = vmatprep.subr.mxu0 0.0
    %1472 = vmatpush1.msra.mxu0 0.0
    %1473 = vmatprep.subr.mxu0 0.0
    %1474 = vmatpush1.msra.mxu0 0.0
    %1475 = vmatprep.subr.mxu0 0.0
    %1476 = vmatpush1.msra.mxu0 0.0
    %1477 = vmatprep.subr.mxu0 0.0
    %1478 = vmatpush1.msra.mxu0 0.0
    %1479 = vmatprep.subr.mxu0 0.0
    %1480 = vmatpush1.msra.mxu0 0.0
    %1481 = vmatprep.mubr.f32.mxu0 0.0
    %1482 = vmatmul.mubr.f32.gmra.mrb[0].mxu0 %v1415
    %v1483 = vpop.f32.mrb[0].mxu0
    %v1484 = vadd.f32 0.0, %v1483
    %v1485 = vpop.f32.mrb[0].mxu0
    %1486 = vdwg.mxu0
    %v1488 = vsel %vm18, %v1484, 0
    %1490 = vmatprep.subr.mxu0 0.0
    %1491 = vmatpush1.msra.mxu0 %v573
    %1492 = vmatprep.subr.mxu0 0.0
    %1493 = vmatpush1.msra.mxu0 %v574
    %1494 = vmatprep.subr.mxu0 0.0
    %1495 = vmatpush1.msra.mxu0 %v575
    %1496 = vmatprep.subr.mxu0 0.0
    %1497 = vmatpush1.msra.mxu0 %v576
    %1498 = vmatprep.subr.mxu0 0.0
    %1499 = vmatpush1.msra.mxu0 %v577
    %1500 = vmatprep.subr.mxu0 0.0
    %1501 = vmatpush1.msra.mxu0 %v578
    %1502 = vmatprep.subr.mxu0 0.0
    %1503 = vmatpush1.msra.mxu0 %v579
    %1504 = vmatprep.subr.mxu0 0.0
    %1505 = vmatpush1.msra.mxu0 %v580
    %1506 = vmatprep.subr.mxu0 0.0
    %1507 = vmatpush1.msra.mxu0 0.0
    %1508 = vmatprep.subr.mxu0 0.0
    %1509 = vmatpush1.msra.mxu0 0.0
    %1510 = vmatprep.subr.mxu0 0.0
    %1511 = vmatpush1.msra.mxu0 0.0
    %1512 = vmatprep.subr.mxu0 0.0
    %1513 = vmatpush1.msra.mxu0 0.0
    %1514 = vmatprep.subr.mxu0 0.0
    %1515 = vmatpush1.msra.mxu0 0.0
    %1516 = vmatprep.subr.mxu0 0.0
    %1517 = vmatpush1.msra.mxu0 0.0
    %1518 = vmatprep.subr.mxu0 0.0
    %1519 = vmatpush1.msra.mxu0 0.0
    %1520 = vmatprep.subr.mxu0 0.0
    %1521 = vmatpush1.msra.mxu0 0.0
    %1522 = vmatprep.subr.mxu0 0.0
    %1523 = vmatpush1.msra.mxu0 0.0
    %1524 = vmatprep.subr.mxu0 0.0
    %1525 = vmatpush1.msra.mxu0 0.0
    %1526 = vmatprep.subr.mxu0 0.0
    %1527 = vmatpush1.msra.mxu0 0.0
    %1528 = vmatprep.subr.mxu0 0.0
    %1529 = vmatpush1.msra.mxu0 0.0
    %1530 = vmatprep.subr.mxu0 0.0
    %1531 = vmatpush1.msra.mxu0 0.0
    %1532 = vmatprep.subr.mxu0 0.0
    %1533 = vmatpush1.msra.mxu0 0.0
    %1534 = vmatprep.subr.mxu0 0.0
    %1535 = vmatpush1.msra.mxu0 0.0
    %1536 = vmatprep.subr.mxu0 0.0
    %1537 = vmatpush1.msra.mxu0 0.0
    %1538 = vmatprep.subr.mxu0 0.0
    %1539 = vmatpush1.msra.mxu0 0.0
    %1540 = vmatprep.subr.mxu0 0.0
    %1541 = vmatpush1.msra.mxu0 0.0
    %1542 = vmatprep.subr.mxu0 0.0
    %1543 = vmatpush1.msra.mxu0 0.0
    %1544 = vmatprep.subr.mxu0 0.0
    %1545 = vmatpush1.msra.mxu0 0.0
    %1546 = vmatprep.subr.mxu0 0.0
    %1547 = vmatpush1.msra.mxu0 0.0
    %1548 = vmatprep.subr.mxu0 0.0
    %1549 = vmatpush1.msra.mxu0 0.0
    %1550 = vmatprep.subr.mxu0 0.0
    %1551 = vmatpush1.msra.mxu0 0.0
    %1552 = vmatprep.subr.mxu0 0.0
    %1553 = vmatpush1.msra.mxu0 0.0
    %1554 = vmatprep.mubr.f32.mxu0 0.0
    %1555 = vmatmul.mubr.f32.gmra.mrb[0].mxu0 %v1488
    %v1556 = vpop.f32.mrb[0].mxu0
    %v1557 = vadd.f32 0.0, %v1556
    %v1558 = vpop.f32.mrb[0].mxu0
    %1559 = vdwg.mxu0
    %v1560 = vld [vmem:[%s3 + $0x148] sm:$0xff]
    %v1561 = vlaneseq
    %v1562 = vshrl.u32 %v1561, 7
    %v1563 = vsub.s32 0, %v1562
    %v1564 = vrot.slane %v1557, %v1563
    %v1565 = vmul.f32 %v1560, %v1564
    %v1566 = vld [vmem:[%s3 + $0x150] sm:$0xff]
    %v1567 = vld [vmem:[%s3 + $0x158] sm:$0xff]
    %v1568 = vld [vmem:[%s3 + $0x160] sm:$0xff]
    %v1569 = vld [vmem:[%s3 + $0x168] sm:$0xff]
    %v1570 = vld [vmem:[%s3 + $0x170] sm:$0xff]
    %v1571 = vld [vmem:[%s3 + $0x178] sm:$0xff]
    %v1572 = vld [vmem:[%s3 + $0x180] sm:$0xff]
    %v1573 = vld [vmem:[%s3 + $0x188] sm:$0xff]
    %v1575 = vsel %vm18, %v1565, 0
    %1577 = vmatprep.subr.mxu0 0.0
    %1578 = vmatpush1.msra.mxu0 %v1566
    %1579 = vmatprep.subr.mxu0 0.0
    %1580 = vmatpush1.msra.mxu0 %v1567
    %1581 = vmatprep.subr.mxu0 0.0
    %1582 = vmatpush1.msra.mxu0 %v1568
    %1583 = vmatprep.subr.mxu0 0.0
    %1584 = vmatpush1.msra.mxu0 %v1569
    %1585 = vmatprep.subr.mxu0 0.0
    %1586 = vmatpush1.msra.mxu0 %v1570
    %1587 = vmatprep.subr.mxu0 0.0
    %1588 = vmatpush1.msra.mxu0 %v1571
    %1589 = vmatprep.subr.mxu0 0.0
    %1590 = vmatpush1.msra.mxu0 %v1572
    %1591 = vmatprep.subr.mxu0 0.0
    %1592 = vmatpush1.msra.mxu0 %v1573
    %1593 = vmatprep.subr.mxu0 0.0
    %1594 = vmatpush1.msra.mxu0 0.0
    %1595 = vmatprep.subr.mxu0 0.0
    %1596 = vmatpush1.msra.mxu0 0.0
    %1597 = vmatprep.subr.mxu0 0.0
    %1598 = vmatpush1.msra.mxu0 0.0
    %1599 = vmatprep.subr.mxu0 0.0
    %1600 = vmatpush1.msra.mxu0 0.0
    %1601 = vmatprep.subr.mxu0 0.0
    %1602 = vmatpush1.msra.mxu0 0.0
    %1603 = vmatprep.subr.mxu0 0.0
    %1604 = vmatpush1.msra.mxu0 0.0
    %1605 = vmatprep.subr.mxu0 0.0
    %1606 = vmatpush1.msra.mxu0 0.0
    %1607 = vmatprep.subr.mxu0 0.0
    %1608 = vmatpush1.msra.mxu0 0.0
    %1609 = vmatprep.subr.mxu0 0.0
    %1610 = vmatpush1.msra.mxu0 0.0
    %1611 = vmatprep.subr.mxu0 0.0
    %1612 = vmatpush1.msra.mxu0 0.0
    %1613 = vmatprep.subr.mxu0 0.0
    %1614 = vmatpush1.msra.mxu0 0.0
    %1615 = vmatprep.subr.mxu0 0.0
    %1616 = vmatpush1.msra.mxu0 0.0
    %1617 = vmatprep.subr.mxu0 0.0
    %1618 = vmatpush1.msra.mxu0 0.0
    %1619 = vmatprep.subr.mxu0 0.0
    %1620 = vmatpush1.msra.mxu0 0.0
    %1621 = vmatprep.subr.mxu0 0.0
    %1622 = vmatpush1.msra.mxu0 0.0
    %1623 = vmatprep.subr.mxu0 0.0
    %1624 = vmatpush1.msra.mxu0 0.0
    %1625 = vmatprep.subr.mxu0 0.0
    %1626 = vmatpush1.msra.mxu0 0.0
    %1627 = vmatprep.subr.mxu0 0.0
    %1628 = vmatpush1.msra.mxu0 0.0
    %1629 = vmatprep.subr.mxu0 0.0
    %1630 = vmatpush1.msra.mxu0 0.0
    %1631 = vmatprep.subr.mxu0 0.0
    %1632 = vmatpush1.msra.mxu0 0.0
    %1633 = vmatprep.subr.mxu0 0.0
    %1634 = vmatpush1.msra.mxu0 0.0
    %1635 = vmatprep.subr.mxu0 0.0
    %1636 = vmatpush1.msra.mxu0 0.0
    %1637 = vmatprep.subr.mxu0 0.0
    %1638 = vmatpush1.msra.mxu0 0.0
    %1639 = vmatprep.subr.mxu0 0.0
    %1640 = vmatpush1.msra.mxu0 0.0
    %1641 = vmatprep.mubr.f32.mxu0 0.0
    %1642 = vmatmul.mubr.f32.gmra.mrb[0].mxu0 %v1575
    %v1643 = vpop.f32.mrb[0].mxu0
    %v1644 = vadd.f32 0.0, %v1643
    %v1645 = vpop.f32.mrb[0].mxu0
    %1646 = vdwg.mxu0
    %1648 = vrot.lane.b32.xlu0 %v1560, 64
    %v1649 = vpop.permute.xlu0 %1648
    %v1652 = vsel %vm39, %v1644, 0
    %1654 = vmatprep.subr.mxu0 0.0
    %1655 = vmatpush1.msra.mxu0 %v1649
    %1656 = vmatprep.subr.mxu0 0.0
    %1657 = vmatpush1.msra.mxu0 0.0
    %1658 = vmatprep.subr.mxu0 0.0
    %1659 = vmatpush1.msra.mxu0 0.0
    %1660 = vmatprep.subr.mxu0 0.0
    %1661 = vmatpush1.msra.mxu0 0.0
    %1662 = vmatprep.subr.mxu0 0.0
    %1663 = vmatpush1.msra.mxu0 0.0
    %1664 = vmatprep.subr.mxu0 0.0
    %1665 = vmatpush1.msra.mxu0 0.0
    %1666 = vmatprep.subr.mxu0 0.0
    %1667 = vmatpush1.msra.mxu0 0.0
    %1668 = vmatprep.subr.mxu0 0.0
    %1669 = vmatpush1.msra.mxu0 0.0
    %1670 = vmatprep.subr.mxu0 0.0
    %1671 = vmatpush1.msra.mxu0 0.0
    %1672 = vmatprep.subr.mxu0 0.0
    %1673 = vmatpush1.msra.mxu0 0.0
    %1674 = vmatprep.subr.mxu0 0.0
    %1675 = vmatpush1.msra.mxu0 0.0
    %1676 = vmatprep.subr.mxu0 0.0
    %1677 = vmatpush1.msra.mxu0 0.0
    %1678 = vmatprep.subr.mxu0 0.0
    %1679 = vmatpush1.msra.mxu0 0.0
    %1680 = vmatprep.subr.mxu0 0.0
    %1681 = vmatpush1.msra.mxu0 0.0
    %1682 = vmatprep.subr.mxu0 0.0
    %1683 = vmatpush1.msra.mxu0 0.0
    %1684 = vmatprep.subr.mxu0 0.0
    %1685 = vmatpush1.msra.mxu0 0.0
    %1686 = vmatprep.subr.mxu0 0.0
    %1687 = vmatpush1.msra.mxu0 0.0
    %1688 = vmatprep.subr.mxu0 0.0
    %1689 = vmatpush1.msra.mxu0 0.0
    %1690 = vmatprep.subr.mxu0 0.0
    %1691 = vmatpush1.msra.mxu0 0.0
    %1692 = vmatprep.subr.mxu0 0.0
    %1693 = vmatpush1.msra.mxu0 0.0
    %1694 = vmatprep.subr.mxu0 0.0
    %1695 = vmatpush1.msra.mxu0 0.0
    %1696 = vmatprep.subr.mxu0 0.0
    %1697 = vmatpush1.msra.mxu0 0.0
    %1698 = vmatprep.subr.mxu0 0.0
    %1699 = vmatpush1.msra.mxu0 0.0
    %1700 = vmatprep.subr.mxu0 0.0
    %1701 = vmatpush1.msra.mxu0 0.0
    %1702 = vmatprep.subr.mxu0 0.0
    %1703 = vmatpush1.msra.mxu0 0.0
    %1704 = vmatprep.subr.mxu0 0.0
    %1705 = vmatpush1.msra.mxu0 0.0
    %1706 = vmatprep.subr.mxu0 0.0
    %1707 = vmatpush1.msra.mxu0 0.0
    %1708 = vmatprep.subr.mxu0 0.0
    %1709 = vmatpush1.msra.mxu0 0.0
    %1710 = vmatprep.subr.mxu0 0.0
    %1711 = vmatpush1.msra.mxu0 0.0
    %1712 = vmatprep.subr.mxu0 0.0
    %1713 = vmatpush1.msra.mxu0 0.0
    %1714 = vmatprep.subr.mxu0 0.0
    %1715 = vmatpush1.msra.mxu0 0.0
    %1716 = vmatprep.subr.mxu0 0.0
    %1717 = vmatpush1.msra.mxu0 0.0
    %1718 = vmatprep.mubr.f32.mxu0 0.0
    %1719 = vmatmul.mubr.f32.gmra.mrb[0].mxu0 %v1652
    %v1720 = vpop.f32.mrb[0].mxu0
    %v1721 = vadd.f32 0.0, %v1720
    %v1722 = vpop.f32.mrb[0].mxu0
    %1723 = vdwg.mxu0
    %v1724 = vld [vmem:[%s3 + $0x190] sm:$0xff]
    %v1725 = vld [vmem:[%s3 + $0x198] sm:$0xff]
    %v1726 = vld [vmem:[%s3 + $0x1a0] sm:$0xff]
    %v1727 = vld [vmem:[%s3 + $0x1a8] sm:$0xff]
    %v1728 = vld [vmem:[%s3 + $0x1b0] sm:$0xff]
    %v1729 = vld [vmem:[%s3 + $0x1b8] sm:$0xff]
    %v1730 = vld [vmem:[%s3 + $0x1c0] sm:$0xff]
    %v1731 = vld [vmem:[%s3 + $0x1c8] sm:$0xff]
    %v1733 = vsel %vm39, %v1724, 0
    %v1736 = vsel %vm39, %v1725, 0
    %v1739 = vsel %vm39, %v1726, 0
    %v1742 = vsel %vm39, %v1727, 0
    %v1745 = vsel %vm39, %v1728, 0
    %v1748 = vsel %vm39, %v1729, 0
    %v1751 = vsel %vm39, %v1730, 0
    %v1754 = vsel %vm39, %v1731, 0
    %1756 = vmatprep.subr.mxu0 0.0
    %1757 = vmatpush1.msra.mxu0 %v1721
    %1758 = vmatprep.subr.mxu0 0.0
    %1759 = vmatpush1.msra.mxu0 0.0
    %1760 = vmatprep.subr.mxu0 0.0
    %1761 = vmatpush1.msra.mxu0 0.0
    %1762 = vmatprep.subr.mxu0 0.0
    %1763 = vmatpush1.msra.mxu0 0.0
    %1764 = vmatprep.subr.mxu0 0.0
    %1765 = vmatpush1.msra.mxu0 0.0
    %1766 = vmatprep.subr.mxu0 0.0
    %1767 = vmatpush1.msra.mxu0 0.0
    %1768 = vmatprep.subr.mxu0 0.0
    %1769 = vmatpush1.msra.mxu0 0.0
    %1770 = vmatprep.subr.mxu0 0.0
    %1771 = vmatpush1.msra.mxu0 0.0
    %1772 = vmatprep.subr.mxu0 0.0
    %1773 = vmatpush1.msra.mxu0 0.0
    %1774 = vmatprep.subr.mxu0 0.0
    %1775 = vmatpush1.msra.mxu0 0.0
    %1776 = vmatprep.subr.mxu0 0.0
    %1777 = vmatpush1.msra.mxu0 0.0
    %1778 = vmatprep.subr.mxu0 0.0
    %1779 = vmatpush1.msra.mxu0 0.0
    %1780 = vmatprep.subr.mxu0 0.0
    %1781 = vmatpush1.msra.mxu0 0.0
    %1782 = vmatprep.subr.mxu0 0.0
    %1783 = vmatpush1.msra.mxu0 0.0
    %1784 = vmatprep.subr.mxu0 0.0
    %1785 = vmatpush1.msra.mxu0 0.0
    %1786 = vmatprep.subr.mxu0 0.0
    %1787 = vmatpush1.msra.mxu0 0.0
    %1788 = vmatprep.subr.mxu0 0.0
    %1789 = vmatpush1.msra.mxu0 0.0
    %1790 = vmatprep.subr.mxu0 0.0
    %1791 = vmatpush1.msra.mxu0 0.0
    %1792 = vmatprep.subr.mxu0 0.0
    %1793 = vmatpush1.msra.mxu0 0.0
    %1794 = vmatprep.subr.mxu0 0.0
    %1795 = vmatpush1.msra.mxu0 0.0
    %1796 = vmatprep.subr.mxu0 0.0
    %1797 = vmatpush1.msra.mxu0 0.0
    %1798 = vmatprep.subr.mxu0 0.0
    %1799 = vmatpush1.msra.mxu0 0.0
    %1800 = vmatprep.subr.mxu0 0.0
    %1801 = vmatpush1.msra.mxu0 0.0
    %1802 = vmatprep.subr.mxu0 0.0
    %1803 = vmatpush1.msra.mxu0 0.0
    %1804 = vmatprep.subr.mxu0 0.0
    %1805 = vmatpush1.msra.mxu0 0.0
    %1806 = vmatprep.subr.mxu0 0.0
    %1807 = vmatpush1.msra.mxu0 0.0
    %1808 = vmatprep.subr.mxu0 0.0
    %1809 = vmatpush1.msra.mxu0 0.0
    %1810 = vmatprep.subr.mxu0 0.0
    %1811 = vmatpush1.msra.mxu0 0.0
    %1812 = vmatprep.subr.mxu0 0.0
    %1813 = vmatpush1.msra.mxu0 0.0
    %1814 = vmatprep.subr.mxu0 0.0
    %1815 = vmatpush1.msra.mxu0 0.0
    %1816 = vmatprep.subr.mxu0 0.0
    %1817 = vmatpush1.msra.mxu0 0.0
    %1818 = vmatprep.subr.mxu0 0.0
    %1819 = vmatpush1.msra.mxu0 0.0
    %1820 = vmatprep.mubr.f32.mxu0 0.0
    %1821 = vmatmul.mubr.f32.gmra.mrb[0].mxu0 %v1733
    %v1822 = vpop.f32.mrb[0].mxu0
    %v1823 = vadd.f32 0.0, %v1822
    %v1824 = vpop.f32.mrb[0].mxu0
    %1825 = vmatprep.mubr.f32.mxu0 0.0
    %1826 = vmatmul.mubr.f32.gmra.mrb[0].mxu0 %v1736
    %v1827 = vpop.f32.mrb[0].mxu0
    %v1828 = vadd.f32 0.0, %v1827
    %v1829 = vpop.f32.mrb[0].mxu0
    %1830 = vmatprep.mubr.f32.mxu0 0.0
    %1831 = vmatmul.mubr.f32.gmra.mrb[0].mxu0 %v1739
    %v1832 = vpop.f32.mrb[0].mxu0
    %v1833 = vadd.f32 0.0, %v1832
    %v1834 = vpop.f32.mrb[0].mxu0
    %1835 = vmatprep.mubr.f32.mxu0 0.0
    %1836 = vmatmul.mubr.f32.gmra.mrb[0].mxu0 %v1742
    %v1837 = vpop.f32.mrb[0].mxu0
    %v1838 = vadd.f32 0.0, %v1837
    %v1839 = vpop.f32.mrb[0].mxu0
    %1840 = vmatprep.mubr.f32.mxu0 0.0
    %1841 = vmatmul.mubr.f32.gmra.mrb[0].mxu0 %v1745
    %v1842 = vpop.f32.mrb[0].mxu0
    %v1843 = vadd.f32 0.0, %v1842
    %v1844 = vpop.f32.mrb[0].mxu0
    %1845 = vmatprep.mubr.f32.mxu0 0.0
    %1846 = vmatmul.mubr.f32.gmra.mrb[0].mxu0 %v1748
    %v1847 = vpop.f32.mrb[0].mxu0
    %v1848 = vadd.f32 0.0, %v1847
    %v1849 = vpop.f32.mrb[0].mxu0
    %1850 = vmatprep.mubr.f32.mxu0 0.0
    %1851 = vmatmul.mubr.f32.gmra.mrb[0].mxu0 %v1751
    %v1852 = vpop.f32.mrb[0].mxu0
    %v1853 = vadd.f32 0.0, %v1852
    %v1854 = vpop.f32.mrb[0].mxu0
    %1855 = vmatprep.mubr.f32.mxu0 0.0
    %1856 = vmatmul.mubr.f32.gmra.mrb[0].mxu0 %v1754
    %v1857 = vpop.f32.mrb[0].mxu0
    %v1858 = vadd.f32 0.0, %v1857
    %v1859 = vpop.f32.mrb[0].mxu0
    %1860 = vdwg.mxu0
    %1861 = vst.msk [vmem:[%s4] sm:$0xff] %vm18, %v1823
    %1862 = vst.msk [vmem:[%s4 + $0x8] sm:$0xff] %vm18, %v1828
    %1863 = vst.msk [vmem:[%s4 + $0x10] sm:$0xff] %vm18, %v1833
    %1864 = vst.msk [vmem:[%s4 + $0x18] sm:$0xff] %vm18, %v1838
    %1865 = vst.msk [vmem:[%s4 + $0x20] sm:$0xff] %vm18, %v1843
    %1866 = vst.msk [vmem:[%s4 + $0x28] sm:$0xff] %vm18, %v1848
    %1867 = vst.msk [vmem:[%s4 + $0x30] sm:$0xff] %vm18, %v1853
    %1868 = vst.msk [vmem:[%s4 + $0x38] sm:$0xff] %vm18, %v1858
  $region21: #{sam_decoder_nuke_forward.1} parent=0 // pred_fallthru
    _
  // Predicated region
  $region22: #{sam_decoder_nuke_forward.1} parent=0 // pred_check
    _
  $region23: #{sam_decoder_nuke_forward.1} parent=0 // pred_check_branch
    %1870 = sbr.rel (0) target = $region25
  $region24: #{sam_decoder_nuke_forward.1} parent=0 // pred_region
    _
  $region25: #{sam_decoder_nuke_forward.1} parent=0 // pred_fallthru
    _
  // Predicated region
  $region26: #{sam_decoder_nuke_forward.1} parent=0 // pred_check
    _
  $region27: #{sam_decoder_nuke_forward.1} parent=0 // pred_check_branch
    %1872 = sbr.rel (0) target = $region29
  $region28: #{sam_decoder_nuke_forward.1} parent=0 // pred_region
    _
  $region29: #{sam_decoder_nuke_forward.1} parent=0 // pred_fallthru
    _

</llo_original>
